<compile_context>
chip_gen: v6e
topology: v6e:2x2x1
jax: 0.10.0
libtpu: 0.0.40
codegen_flags: <defaults>
</compile_context>

<pallas_src>
import functools

import numpy as np
import jax
import jax.numpy as jnp
from jax.experimental import pallas as pl
from jax.experimental.pallas import tpu as pltpu

# Small synthetic config (consistent with the module's shape constraints).
PARAMS = dict(
    num_atom_features=16,
    num_bond_features=8,
    max_degree=4,
    graph_conv_width=(32, 32, 32),
    conv1d_in=16,        # must equal max_atoms: conv1d sees x3 of shape (B, max_atoms, C3)
    conv1d_out=16,
    kernel_size=1,       # keeps bn4's num_features formula equal to the conv output length
    dropout_encoder=0.1,
)
BATCH = 8
MAX_ATOMS = PARAMS["conv1d_in"]
BN_EPS = 1e-5

# bn4 shape-consistency check, exactly as the torch module implies.
assert int((PARAMS["graph_conv_width"][1] - PARAMS["kernel_size"]) / PARAMS["kernel_size"] + 1) \
    == PARAMS["graph_conv_width"][2] - PARAMS["kernel_size"] + 1


def _enc_graph_kernel(atomsT_ref, adjT_ref, deg_ref, rowdeg_ref,
                      sb1_ref, sb2_ref, sb3_ref,
                      wa1_ref, wa2_ref, wa3_ref,
                      summatT_ref, wcT_ref, unif_ref, out_ref,
                      *, kernel_size, drop_p):
    adjT = adjT_ref[...]          # (BA, BA)        bf16 block-diag adjacency^T (+ self)
    summatT = summatT_ref[...]    # (cout, D*cout)  bf16 degree-sum matrix^T (0/1)
    ba = adjT.shape[0]
    dco = summatT.shape[1]

    # Degree one-hot mask rebuilt in-kernel from tiny index vectors: (D*cout, BA).
    degmask = (jnp.broadcast_to(rowdeg_ref[...], (dco, ba)) ==
               jnp.broadcast_to(deg_ref[...], (dco, ba))).astype(jnp.float32)

    def bn_relu(x):
        # nn.BatchNorm1d training mode (biased batch stats; gamma=1, beta=0 defaults).
        # Feature-major layout -> stats per row over the 128 lanes; reductions done on
        # the (otherwise idle) MXU via dot-with-ones; centered two-pass variance.
        n = x.shape[1]
        inv_n = 1.0 / n
        ones_col = jnp.ones((n, 1), jnp.float32)
        m = jnp.dot(x, ones_col, preferred_element_type=jnp.float32) * inv_n
        xc = x - m
        v = jnp.dot(xc * xc, ones_col, preferred_element_type=jnp.float32) * inv_n
        return jnp.maximum(xc * jax.lax.rsqrt(v + BN_EPS), 0.0)

    def ngh(xT, waT_ref, sbias_ref):
        # NeuralGraphHidden, feature-major: nsum^T = x^T @ adj^T; the stacked-degree
        # dense is Wa_stack^T @ nsum^T plus the wrapper-prefolded bond/bias slab; the
        # degree mask + sum over degrees folds into one (cout, D*cout) matmul.
        nsumT = jnp.dot(xT.astype(jnp.bfloat16), adjT,
                        preferred_element_type=jnp.float32)
        linT = jnp.dot(waT_ref[...], nsumT.astype(jnp.bfloat16),
                       preferred_element_type=jnp.float32) + sbias_ref[...]
        maskedT = (linT * degmask).astype(jnp.bfloat16)
        return jnp.dot(summatT, maskedT, preferred_element_type=jnp.float32)

    x = atomsT_ref[...]                                  # (num_atom_features, BA) f32
    x = bn_relu(ngh(x, wa1_ref, sb1_ref))                # g1 / bn1 / relu
    x = bn_relu(ngh(x, wa2_ref, sb2_ref))                # g2 / bn2 / relu
    x = bn_relu(ngh(x, wa3_ref, sb3_ref))                # g3 / bn3 / relu -> x3^T (c3, BA)

    # conv1d (bias=False, stride 1) on NCL input with C_in = max_atoms, feature-major:
    # one lane-dense matmul per tap: y^T = x3^T[t:t+L,:] @ wc_bd[t]^T -> (L_out, B*co).
    c3 = x.shape[0]
    l_out = c3 - kernel_size + 1
    xb = x.astype(jnp.bfloat16)
    y = jnp.dot(xb[0:l_out, :], wcT_ref[0], preferred_element_type=jnp.float32)
    for t in range(1, kernel_size):
        y = y + jnp.dot(xb[t:t + l_out, :], wcT_ref[t],
                        preferred_element_type=jnp.float32)

    yf = bn_relu(y)                                      # bn4 / relu, (L_out, B*co)

    if drop_p > 0.0:
        # nn.Dropout, training-mode inverted dropout.
        # TODO(synk): uniforms come from jax.random in the wrapper (pltpu.prng_* skipped);
        #             RNG stream differs from torch's but is distributionally equivalent.
        keep = unif_ref[...] >= drop_p
        yf = jnp.where(keep, yf * (1.0 / (1.0 - drop_p)), 0.0)

    out_ref[...] = yf.astype(out_ref.dtype)              # lane-dense (L_out, B*co) store


def enc_graph_pallas(atoms, bonds, edges, weights, params, drop_p, dropout_key=None):
    B, A, fa = atoms.shape
    D = params["max_degree"]
    k = params["kernel_size"]
    co = params["conv1d_out"]
    cw = params["graph_conv_width"]
    assert cw[0] == cw[1] == cw[2], "stacked-degree packing assumes equal conv widths"
    cout = cw[0]
    l_out = cw[2] - k + 1
    BA = B * A

    # Scaling guard (perf review): the block-diag (BA,BA) adjacency is O(B^2) bytes/flops
    # and would hit the v7x 64 MiB VMEM ceiling (and v5e's 16 MiB default scoped limit)
    # long before it pays off.  This single-call design targets small batches.
    # TODO(synk): for BA >~ 1024 switch to a per-graph grid (grid over B, (A,A) adjacency
    #             blocks, BN stats accumulated in VMEM scratch + finalize pass) and set
    #             pltpu.CompilerParams(vmem_limit_bytes=...).
    assert BA <= 1024, "block-diagonal enc_graph kernel is intended for small batches"

    # ---- wrapper-side layout plumbing (cheap XLA ops, outside the kernel hot path) ----
    # dense adjacency (+ I == include_self), embedded block-diagonally, transposed, bf16.
    one_hot = (edges[..., None] == jnp.arange(A, dtype=edges.dtype)).astype(jnp.float32)
    adj = one_hot.sum(axis=2) + jnp.eye(A, dtype=jnp.float32)[None]
    adj_bd = (adj[:, :, None, :] *
              jnp.eye(B, dtype=jnp.float32)[:, None, :, None]).reshape(BA, BA)
    adjT = adj_bd.T.astype(jnp.bfloat16)                                # (BA, BA)

    # per-atom degree (1, BA) and per-row degree index (D*cout, 1) for the in-kernel mask
    deg_row = (edges != -1).sum(axis=-1).reshape(1, BA).astype(jnp.int32)
    rowdeg_col = jnp.repeat(jnp.arange(D, dtype=jnp.int32), cout).reshape(D * cout, 1)

    atomsT = atoms.reshape(BA, fa).T.astype(jnp.float32)                # (fa, BA)
    sbond_flat = bonds.sum(axis=2).reshape(BA, -1)                      # (BA, fb)
    summatT = jnp.tile(jnp.eye(cout, dtype=jnp.float32), (1, D)).astype(jnp.bfloat16)

    def stack_wa(wa):          # (D, fin, cout) -> (D*cout, fin) bf16 (transposed stack)
        w = jnp.transpose(wa, (1, 0, 2)).reshape(wa.shape[1], D * cout)
        return w.T.astype(jnp.bfloat16)

    def sbias(wb, bb):         # prefold bond-feature + bias contribution -> (D*cout, BA) f32
        wbs = jnp.transpose(wb, (1, 0, 2)).reshape(wb.shape[1], D * cout)
        bbs = bb.reshape(1, D * cout)
        return (sbond_flat @ wbs + bbs).T.astype(jnp.float32)

    wa1, wa2, wa3 = (stack_wa(weights["w1a"]), stack_wa(weights["w2a"]),
                     stack_wa(weights["w3a"]))
    sb1 = sbias(weights["w1b"], weights["b1"])
    sb2 = sbias(weights["w2b"], weights["b2"])
    sb3 = sbias(weights["w3b"], weights["b3"])

    # conv1d weights (k, co, A) -> block-diagonal per tap, transposed: (k, BA, B*co) bf16
    wc = weights["wc"]
    wc_bd = (wc[:, None, :, None, :] *
             jnp.eye(B, dtype=jnp.float32)[None, :, None, :, None]).reshape(k, B * co, BA)
    wcT = jnp.transpose(wc_bd, (0, 2, 1)).astype(jnp.bfloat16)

    if drop_p > 0.0:
        unif = jax.random.uniform(dropout_key, (l_out, B * co), jnp.float32)
    else:
        unif = jnp.ones((l_out, B * co), jnp.float32)

    operands = (atomsT, adjT, deg_row, rowdeg_col, sb1, sb2, sb3,
                wa1, wa2, wa3, summatT, wcT, unif)

    kernel = functools.partial(_enc_graph_kernel, kernel_size=k, drop_p=float(drop_p))
    outT = pl.pallas_call(
        kernel,
        out_shape=jax.ShapeDtypeStruct((l_out, B * co), jnp.float32),
        in_specs=[pl.BlockSpec(memory_space=pltpu.MemorySpace.VMEM)] * len(operands),
        out_specs=pl.BlockSpec(memory_space=pltpu.MemorySpace.VMEM),
    )(*operands)

    # layout plumbing back to the module's (B, conv1d_out, L_out) output shape
    return outT.T.reshape(B, co, l_out)


def enc_graph_reference(atoms, bonds, edges, weights, params):
    """Pure-JAX replica of the torch forward (train-mode BN, dropout disabled)."""
    B, A, _ = atoms.shape
    D = params["max_degree"]
    k = params["kernel_size"]
    one_hot = (edges[..., None] == jnp.arange(A, dtype=edges.dtype)).astype(jnp.float32)
    adj = one_hot.sum(axis=2) + jnp.eye(A, dtype=jnp.float32)[None]
    deg_cnt = (edges != -1).sum(axis=-1)
    sbond = bonds.sum(axis=2)

    def bn(x, axes):
        m = jnp.mean(x, axis=axes, keepdims=True)
        v = jnp.mean(jnp.square(x - m), axis=axes, keepdims=True)
        return (x - m) * jax.lax.rsqrt(v + BN_EPS)

    def ngh(x, wa, wb, bb):
        nsum = jnp.einsum("bij,bjf->bif", adj, x)
        out = jnp.zeros(x.shape[:2] + (wa.shape[-1],), jnp.float32)
        for d in range(D):
            mask = (deg_cnt == d)[..., None].astype(jnp.float32)
            out = out + (nsum @ wa[d] + sbond @ wb[d] + bb[d]) * mask
        return out

    x = jax.nn.relu(bn(ngh(atoms, weights["w1a"], weights["w1b"], weights["b1"]), (0, 1)))
    x = jax.nn.relu(bn(ngh(x, weights["w2a"], weights["w2b"], weights["b2"]), (0, 1)))
    x3 = jax.nn.relu(bn(ngh(x, weights["w3a"], weights["w3b"], weights["b3"]), (0, 1)))

    l_out = x3.shape[-1] - k + 1
    y = jnp.zeros((B, params["conv1d_out"], l_out), jnp.float32)
    for t in range(k):
        y = y + jnp.einsum("oi,bil->bol", weights["wc"][t], x3[:, :, t:t + l_out])
    return jax.nn.relu(bn(y, (0, 1)))


def init_weights(key, params, max_atoms):
    fa = params["num_atom_features"]
    fb = params["num_bond_features"]
    d = params["max_degree"]
    widths = params["graph_conv_width"]
    k = params["kernel_size"]
    co = params["conv1d_out"]

    keys = jax.random.split(key, 4)
    w = {}
    fins = (fa, widths[0], widths[1])
    for li, (fin, cout) in enumerate(zip(fins, widths), start=1):
        bound = 1.0 / np.sqrt(fin + fb)   # torch nn.Linear default init bound
        ka, kb, kc = jax.random.split(keys[li - 1], 3)
        w[f"w{li}a"] = jax.random.uniform(ka, (d, fin, cout), jnp.float32, -bound, bound)
        w[f"w{li}b"] = jax.random.uniform(kb, (d, fb, cout), jnp.float32, -bound, bound)
        w[f"b{li}"] = jax.random.uniform(kc, (d, 1, cout), jnp.float32, -bound, bound)
    # conv1d weight: xavier_normal_, bias=False; stored as (k, conv1d_out, conv1d_in).
    std = float(np.sqrt(2.0 / (max_atoms * k + co * k)))
    w["wc"] = std * jax.random.normal(keys[3], (k, co, max_atoms), jnp.float32)
    return w


if __name__ == "__main__":
    p = PARAMS
    key = jax.random.PRNGKey(0)
    k_atoms, k_bonds, k_edges, k_deg, k_w, k_drop = jax.random.split(key, 6)

    atoms = jax.random.normal(k_atoms, (BATCH, MAX_ATOMS, p["num_atom_features"]), jnp.float32)
    bonds = jax.random.normal(
        k_bonds, (BATCH, MAX_ATOMS, p["max_degree"], p["num_bond_features"]), jnp.float32)
    nbr = jax.random.randint(k_edges, (BATCH, MAX_ATOMS, p["max_degree"]), 0, MAX_ATOMS)
    n_nbrs = jax.random.randint(k_deg, (BATCH, MAX_ATOMS, 1), 1, p["max_degree"])
    slot = jnp.arange(p["max_degree"])[None, None, :]
    edges = jnp.where(slot < n_nbrs, nbr, -1).astype(jnp.int32)       # -1 padded neighbour list
    bonds = bonds * (edges != -1)[..., None].astype(jnp.float32)      # zero padded bond slots

    weights = init_weights(k_w, p, MAX_ATOMS)

    # Correctness check vs pure-JAX reference (dropout off in both).  The kernel
    # intentionally uses bf16 MXU operands (f32 accumulation), so allow a few percent
    # elementwise slack vs the f32/default-precision XLA reference.
    out_ref = enc_graph_reference(atoms, bonds, edges, weights, p)
    out_nodrop = enc_graph_pallas(atoms, bonds, edges, weights, p, drop_p=0.0)
    jax.block_until_ready(out_nodrop)
    assert out_nodrop.shape == out_ref.shape
    max_err = float(jnp.max(jnp.abs(out_nodrop - out_ref)))
    assert jnp.allclose(out_nodrop, out_ref, atol=5e-2, rtol=5e-2), max_err

    # Full forward including training-mode dropout.
    out = enc_graph_pallas(atoms, bonds, edges, weights, p,
                           drop_p=p["dropout_encoder"], dropout_key=k_drop)
    jax.block_until_ready(out)
    assert out.shape == (BATCH, p["conv1d_out"],
                         p["graph_conv_width"][2] - p["kernel_size"] + 1)
    assert bool(jnp.all(jnp.isfinite(out)))
    print("KERNEL_OK")
</pallas_src>

<mosaic_0001>
module attributes {stable_mosaic.version = 11 : i64} {
  func.func @_enc_graph_kernel(%arg0: memref<16x128xf32, #tpu.memory_space<vmem>>, %arg1: memref<128x128xbf16, #tpu.memory_space<vmem>>, %arg2: memref<1x128xi32, #tpu.memory_space<vmem>>, %arg3: memref<128x1xi32, #tpu.memory_space<vmem>>, %arg4: memref<128x128xf32, #tpu.memory_space<vmem>>, %arg5: memref<128x128xf32, #tpu.memory_space<vmem>>, %arg6: memref<128x128xf32, #tpu.memory_space<vmem>>, %arg7: memref<128x16xbf16, #tpu.memory_space<vmem>>, %arg8: memref<128x32xbf16, #tpu.memory_space<vmem>>, %arg9: memref<128x32xbf16, #tpu.memory_space<vmem>>, %arg10: memref<32x128xbf16, #tpu.memory_space<vmem>>, %arg11: memref<1x128x128xbf16, #tpu.memory_space<vmem>>, %arg12: memref<32x128xf32, #tpu.memory_space<vmem>>, %arg13: memref<32x128xf32, #tpu.memory_space<vmem>>) attributes {dimension_semantics = [], scalar_prefetch = 0 : i64, scratch_operands = 0 : i64, tpu.core_type = #tpu.core_type<tc>} {
    %c0 = arith.constant 0 : index
    %c0_0 = arith.constant 0 : index
    %0 = vector.load %arg1[%c0, %c0_0] : memref<128x128xbf16, #tpu.memory_space<vmem>>, vector<128x128xbf16>
    %c0_1 = arith.constant 0 : index
    %c0_2 = arith.constant 0 : index
    %1 = vector.load %arg10[%c0_1, %c0_2] : memref<32x128xbf16, #tpu.memory_space<vmem>>, vector<32x128xbf16>
    %c0_3 = arith.constant 0 : index
    %c0_4 = arith.constant 0 : index
    %2 = vector.load %arg3[%c0_3, %c0_4] : memref<128x1xi32, #tpu.memory_space<vmem>>, vector<128x1xi32>
    %3 = vector.shape_cast %2 : vector<128x1xi32> to vector<128x1xi32>
    %4 = vector.broadcast %3 : vector<128x1xi32> to vector<128x128xi32>
    %c0_5 = arith.constant 0 : index
    %c0_6 = arith.constant 0 : index
    %5 = vector.load %arg2[%c0_5, %c0_6] : memref<1x128xi32, #tpu.memory_space<vmem>>, vector<1x128xi32>
    %6 = vector.shape_cast %5 : vector<1x128xi32> to vector<1x128xi32>
    %7 = vector.broadcast %6 : vector<1x128xi32> to vector<128x128xi32>
    %8 = arith.cmpi eq, %4, %7 : vector<128x128xi32>
    %9 = arith.extui %8 : vector<128x128xi1> to vector<128x128xi32>
    %10 = arith.sitofp %9 : vector<128x128xi32> to vector<128x128xf32>
    %c0_7 = arith.constant 0 : index
    %c0_8 = arith.constant 0 : index
    %11 = vector.load %arg0[%c0_7, %c0_8] : memref<16x128xf32, #tpu.memory_space<vmem>>, vector<16x128xf32>
    %12 = arith.truncf %11 : vector<16x128xf32> to vector<16x128xbf16>
    %cst = arith.constant dense<0.000000e+00> : vector<16x128xf32>
    %13 = tpu.matmul %12, %0, %cst {dimension_numbers = #tpu.dot_dimension_numbers<[1], [0], [0], [1], [0, 0, 1, 1], [], []>} : vector<16x128xbf16>, vector<128x128xbf16>, vector<16x128xf32> -> vector<16x128xf32>
    %c0_9 = arith.constant 0 : index
    %c0_10 = arith.constant 0 : index
    %14 = vector.load %arg7[%c0_9, %c0_10] : memref<128x16xbf16, #tpu.memory_space<vmem>>, vector<128x16xbf16>
    %15 = arith.truncf %13 : vector<16x128xf32> to vector<16x128xbf16>
    %cst_11 = arith.constant dense<0.000000e+00> : vector<128x128xf32>
    %16 = tpu.matmul %14, %15, %cst_11 {dimension_numbers = #tpu.dot_dimension_numbers<[1], [0], [0], [1], [0, 0, 1, 1], [], []>} : vector<128x16xbf16>, vector<16x128xbf16>, vector<128x128xf32> -> vector<128x128xf32>
    %c0_12 = arith.constant 0 : index
    %c0_13 = arith.constant 0 : index
    %17 = vector.load %arg4[%c0_12, %c0_13] : memref<128x128xf32, #tpu.memory_space<vmem>>, vector<128x128xf32>
    %18 = arith.addf %16, %17 : vector<128x128xf32>
    %19 = arith.mulf %18, %10 : vector<128x128xf32>
    %20 = arith.truncf %19 : vector<128x128xf32> to vector<128x128xbf16>
    %cst_14 = arith.constant dense<0.000000e+00> : vector<32x128xf32>
    %21 = tpu.matmul %1, %20, %cst_14 {dimension_numbers = #tpu.dot_dimension_numbers<[1], [0], [0], [1], [0, 0, 1, 1], [], []>} : vector<32x128xbf16>, vector<128x128xbf16>, vector<32x128xf32> -> vector<32x128xf32>
    %cst_15 = arith.constant 1.000000e+00 : f32
    %22 = vector.broadcast %cst_15 : f32 to vector<128x1xf32>
    %cst_16 = arith.constant dense<0.000000e+00> : vector<32x1xf32>
    %23 = tpu.matmul %21, %22, %cst_16 {dimension_numbers = #tpu.dot_dimension_numbers<[1], [0], [0], [1], [0, 0, 1, 1], [], []>} : vector<32x128xf32>, vector<128x1xf32>, vector<32x1xf32> -> vector<32x1xf32>
    %cst_17 = arith.constant 7.812500e-03 : f32
    %24 = vector.broadcast %cst_17 : f32 to vector<32x1xf32>
    %25 = arith.mulf %23, %24 : vector<32x1xf32>
    %26 = vector.broadcast %25 : vector<32x1xf32> to vector<32x128xf32>
    %27 = arith.subf %21, %26 : vector<32x128xf32>
    %28 = arith.mulf %27, %27 : vector<32x128xf32>
    %cst_18 = arith.constant dense<0.000000e+00> : vector<32x1xf32>
    %29 = tpu.matmul %28, %22, %cst_18 {dimension_numbers = #tpu.dot_dimension_numbers<[1], [0], [0], [1], [0, 0, 1, 1], [], []>} : vector<32x128xf32>, vector<128x1xf32>, vector<32x1xf32> -> vector<32x1xf32>
    %cst_19 = arith.constant 7.812500e-03 : f32
    %30 = vector.broadcast %cst_19 : f32 to vector<32x1xf32>
    %31 = arith.mulf %29, %30 : vector<32x1xf32>
    %cst_20 = arith.constant 9.99999974E-6 : f32
    %32 = vector.broadcast %cst_20 : f32 to vector<32x1xf32>
    %33 = arith.addf %31, %32 : vector<32x1xf32>
    %34 = math.rsqrt %33 : vector<32x1xf32>
    %35 = vector.broadcast %34 : vector<32x1xf32> to vector<32x128xf32>
    %36 = arith.mulf %27, %35 : vector<32x128xf32>
    %cst_21 = arith.constant 0.000000e+00 : f32
    %37 = vector.broadcast %cst_21 : f32 to vector<32x128xf32>
    %38 = arith.maximumf %36, %37 : vector<32x128xf32>
    %39 = arith.truncf %38 : vector<32x128xf32> to vector<32x128xbf16>
    %cst_22 = arith.constant dense<0.000000e+00> : vector<32x128xf32>
    %40 = tpu.matmul %39, %0, %cst_22 {dimension_numbers = #tpu.dot_dimension_numbers<[1], [0], [0], [1], [0, 0, 1, 1], [], []>} : vector<32x128xbf16>, vector<128x128xbf16>, vector<32x128xf32> -> vector<32x128xf32>
    %c0_23 = arith.constant 0 : index
    %c0_24 = arith.constant 0 : index
    %41 = vector.load %arg8[%c0_23, %c0_24] : memref<128x32xbf16, #tpu.memory_space<vmem>>, vector<128x32xbf16>
    %42 = arith.truncf %40 : vector<32x128xf32> to vector<32x128xbf16>
    %cst_25 = arith.constant dense<0.000000e+00> : vector<128x128xf32>
    %43 = tpu.matmul %41, %42, %cst_25 {dimension_numbers = #tpu.dot_dimension_numbers<[1], [0], [0], [1], [0, 0, 1, 1], [], []>} : vector<128x32xbf16>, vector<32x128xbf16>, vector<128x128xf32> -> vector<128x128xf32>
    %c0_26 = arith.constant 0 : index
    %c0_27 = arith.constant 0 : index
    %44 = vector.load %arg5[%c0_26, %c0_27] : memref<128x128xf32, #tpu.memory_space<vmem>>, vector<128x128xf32>
    %45 = arith.addf %43, %44 : vector<128x128xf32>
    %46 = arith.mulf %45, %10 : vector<128x128xf32>
    %47 = arith.truncf %46 : vector<128x128xf32> to vector<128x128xbf16>
    %cst_28 = arith.constant dense<0.000000e+00> : vector<32x128xf32>
    %48 = tpu.matmul %1, %47, %cst_28 {dimension_numbers = #tpu.dot_dimension_numbers<[1], [0], [0], [1], [0, 0, 1, 1], [], []>} : vector<32x128xbf16>, vector<128x128xbf16>, vector<32x128xf32> -> vector<32x128xf32>
    %cst_29 = arith.constant 1.000000e+00 : f32
    %49 = vector.broadcast %cst_29 : f32 to vector<128x1xf32>
    %cst_30 = arith.constant dense<0.000000e+00> : vector<32x1xf32>
    %50 = tpu.matmul %48, %49, %cst_30 {dimension_numbers = #tpu.dot_dimension_numbers<[1], [0], [0], [1], [0, 0, 1, 1], [], []>} : vector<32x128xf32>, vector<128x1xf32>, vector<32x1xf32> -> vector<32x1xf32>
    %cst_31 = arith.constant 7.812500e-03 : f32
    %51 = vector.broadcast %cst_31 : f32 to vector<32x1xf32>
    %52 = arith.mulf %50, %51 : vector<32x1xf32>
    %53 = vector.broadcast %52 : vector<32x1xf32> to vector<32x128xf32>
    %54 = arith.subf %48, %53 : vector<32x128xf32>
    %55 = arith.mulf %54, %54 : vector<32x128xf32>
    %cst_32 = arith.constant dense<0.000000e+00> : vector<32x1xf32>
    %56 = tpu.matmul %55, %49, %cst_32 {dimension_numbers = #tpu.dot_dimension_numbers<[1], [0], [0], [1], [0, 0, 1, 1], [], []>} : vector<32x128xf32>, vector<128x1xf32>, vector<32x1xf32> -> vector<32x1xf32>
    %cst_33 = arith.constant 7.812500e-03 : f32
    %57 = vector.broadcast %cst_33 : f32 to vector<32x1xf32>
    %58 = arith.mulf %56, %57 : vector<32x1xf32>
    %cst_34 = arith.constant 9.99999974E-6 : f32
    %59 = vector.broadcast %cst_34 : f32 to vector<32x1xf32>
    %60 = arith.addf %58, %59 : vector<32x1xf32>
    %61 = math.rsqrt %60 : vector<32x1xf32>
    %62 = vector.broadcast %61 : vector<32x1xf32> to vector<32x128xf32>
    %63 = arith.mulf %54, %62 : vector<32x128xf32>
    %cst_35 = arith.constant 0.000000e+00 : f32
    %64 = vector.broadcast %cst_35 : f32 to vector<32x128xf32>
    %65 = arith.maximumf %63, %64 : vector<32x128xf32>
    %66 = arith.truncf %65 : vector<32x128xf32> to vector<32x128xbf16>
    %cst_36 = arith.constant dense<0.000000e+00> : vector<32x128xf32>
    %67 = tpu.matmul %66, %0, %cst_36 {dimension_numbers = #tpu.dot_dimension_numbers<[1], [0], [0], [1], [0, 0, 1, 1], [], []>} : vector<32x128xbf16>, vector<128x128xbf16>, vector<32x128xf32> -> vector<32x128xf32>
    %c0_37 = arith.constant 0 : index
    %c0_38 = arith.constant 0 : index
    %68 = vector.load %arg9[%c0_37, %c0_38] : memref<128x32xbf16, #tpu.memory_space<vmem>>, vector<128x32xbf16>
    %69 = arith.truncf %67 : vector<32x128xf32> to vector<32x128xbf16>
    %cst_39 = arith.constant dense<0.000000e+00> : vector<128x128xf32>
    %70 = tpu.matmul %68, %69, %cst_39 {dimension_numbers = #tpu.dot_dimension_numbers<[1], [0], [0], [1], [0, 0, 1, 1], [], []>} : vector<128x32xbf16>, vector<32x128xbf16>, vector<128x128xf32> -> vector<128x128xf32>
    %c0_40 = arith.constant 0 : index
    %c0_41 = arith.constant 0 : index
    %71 = vector.load %arg6[%c0_40, %c0_41] : memref<128x128xf32, #tpu.memory_space<vmem>>, vector<128x128xf32>
    %72 = arith.addf %70, %71 : vector<128x128xf32>
    %73 = arith.mulf %72, %10 : vector<128x128xf32>
    %74 = arith.truncf %73 : vector<128x128xf32> to vector<128x128xbf16>
    %cst_42 = arith.constant dense<0.000000e+00> : vector<32x128xf32>
    %75 = tpu.matmul %1, %74, %cst_42 {dimension_numbers = #tpu.dot_dimension_numbers<[1], [0], [0], [1], [0, 0, 1, 1], [], []>} : vector<32x128xbf16>, vector<128x128xbf16>, vector<32x128xf32> -> vector<32x128xf32>
    %cst_43 = arith.constant 1.000000e+00 : f32
    %76 = vector.broadcast %cst_43 : f32 to vector<128x1xf32>
    %cst_44 = arith.constant dense<0.000000e+00> : vector<32x1xf32>
    %77 = tpu.matmul %75, %76, %cst_44 {dimension_numbers = #tpu.dot_dimension_numbers<[1], [0], [0], [1], [0, 0, 1, 1], [], []>} : vector<32x128xf32>, vector<128x1xf32>, vector<32x1xf32> -> vector<32x1xf32>
    %cst_45 = arith.constant 7.812500e-03 : f32
    %78 = vector.broadcast %cst_45 : f32 to vector<32x1xf32>
    %79 = arith.mulf %77, %78 : vector<32x1xf32>
    %80 = vector.broadcast %79 : vector<32x1xf32> to vector<32x128xf32>
    %81 = arith.subf %75, %80 : vector<32x128xf32>
    %82 = arith.mulf %81, %81 : vector<32x128xf32>
    %cst_46 = arith.constant dense<0.000000e+00> : vector<32x1xf32>
    %83 = tpu.matmul %82, %76, %cst_46 {dimension_numbers = #tpu.dot_dimension_numbers<[1], [0], [0], [1], [0, 0, 1, 1], [], []>} : vector<32x128xf32>, vector<128x1xf32>, vector<32x1xf32> -> vector<32x1xf32>
    %cst_47 = arith.constant 7.812500e-03 : f32
    %84 = vector.broadcast %cst_47 : f32 to vector<32x1xf32>
    %85 = arith.mulf %83, %84 : vector<32x1xf32>
    %cst_48 = arith.constant 9.99999974E-6 : f32
    %86 = vector.broadcast %cst_48 : f32 to vector<32x1xf32>
    %87 = arith.addf %85, %86 : vector<32x1xf32>
    %88 = math.rsqrt %87 : vector<32x1xf32>
    %89 = vector.broadcast %88 : vector<32x1xf32> to vector<32x128xf32>
    %90 = arith.mulf %81, %89 : vector<32x128xf32>
    %cst_49 = arith.constant 0.000000e+00 : f32
    %91 = vector.broadcast %cst_49 : f32 to vector<32x128xf32>
    %92 = arith.maximumf %90, %91 : vector<32x128xf32>
    %93 = arith.truncf %92 : vector<32x128xf32> to vector<32x128xbf16>
    %c0_50 = arith.constant 0 : index
    %c0_51 = arith.constant 0 : index
    %c0_52 = arith.constant 0 : index
    %94 = vector.load %arg11[%c0_50, %c0_51, %c0_52] : memref<1x128x128xbf16, #tpu.memory_space<vmem>>, vector<1x128x128xbf16>
    %95 = vector.shape_cast %94 : vector<1x128x128xbf16> to vector<128x128xbf16>
    %cst_53 = arith.constant dense<0.000000e+00> : vector<32x128xf32>
    %96 = tpu.matmul %93, %95, %cst_53 {dimension_numbers = #tpu.dot_dimension_numbers<[1], [0], [0], [1], [0, 0, 1, 1], [], []>} : vector<32x128xbf16>, vector<128x128xbf16>, vector<32x128xf32> -> vector<32x128xf32>
    %cst_54 = arith.constant 1.000000e+00 : f32
    %97 = vector.broadcast %cst_54 : f32 to vector<128x1xf32>
    %cst_55 = arith.constant dense<0.000000e+00> : vector<32x1xf32>
    %98 = tpu.matmul %96, %97, %cst_55 {dimension_numbers = #tpu.dot_dimension_numbers<[1], [0], [0], [1], [0, 0, 1, 1], [], []>} : vector<32x128xf32>, vector<128x1xf32>, vector<32x1xf32> -> vector<32x1xf32>
    %cst_56 = arith.constant 7.812500e-03 : f32
    %99 = vector.broadcast %cst_56 : f32 to vector<32x1xf32>
    %100 = arith.mulf %98, %99 : vector<32x1xf32>
    %101 = vector.broadcast %100 : vector<32x1xf32> to vector<32x128xf32>
    %102 = arith.subf %96, %101 : vector<32x128xf32>
    %103 = arith.mulf %102, %102 : vector<32x128xf32>
    %cst_57 = arith.constant dense<0.000000e+00> : vector<32x1xf32>
    %104 = tpu.matmul %103, %97, %cst_57 {dimension_numbers = #tpu.dot_dimension_numbers<[1], [0], [0], [1], [0, 0, 1, 1], [], []>} : vector<32x128xf32>, vector<128x1xf32>, vector<32x1xf32> -> vector<32x1xf32>
    %cst_58 = arith.constant 7.812500e-03 : f32
    %105 = vector.broadcast %cst_58 : f32 to vector<32x1xf32>
    %106 = arith.mulf %104, %105 : vector<32x1xf32>
    %cst_59 = arith.constant 9.99999974E-6 : f32
    %107 = vector.broadcast %cst_59 : f32 to vector<32x1xf32>
    %108 = arith.addf %106, %107 : vector<32x1xf32>
    %109 = math.rsqrt %108 : vector<32x1xf32>
    %110 = vector.broadcast %109 : vector<32x1xf32> to vector<32x128xf32>
    %111 = arith.mulf %102, %110 : vector<32x128xf32>
    %cst_60 = arith.constant 0.000000e+00 : f32
    %112 = vector.broadcast %cst_60 : f32 to vector<32x128xf32>
    %113 = arith.maximumf %111, %112 : vector<32x128xf32>
    %c0_61 = arith.constant 0 : index
    %c0_62 = arith.constant 0 : index
    %114 = vector.load %arg13[%c0_61, %c0_62] : memref<32x128xf32, #tpu.memory_space<vmem>>, vector<32x128xf32>
    tpu.vector_store %arg13[%c0_61, %c0_62], %113 {strides = array<i32>} : memref<32x128xf32, #tpu.memory_space<vmem>>, vector<32x128xf32>,
    return
  }
}

</mosaic_0001>

<llo_original>
// kernel: tpu_custom_call.1
$region0: #{tpu_custom_call.1}
  #allocation0 [shape = 'u32[]', space=smem, size = 0x4, offset = 0x4, fixed_abs, tag = 'smem constant byte address 0x4 - core index']
  #allocation1 [shape = 'u32[144,128]{1,0:T(1,128)}', space=vmem, size = 0x12000, scoped, tag = 'internal scratch']
  %s0 = inlined_call_operand.hbm [shape: f32[16,128], index: 0, kind: input, shape index: {}]
  %s1 = inlined_call_operand.vmem [shape: bf16[128,128], index: 1, kind: input, shape index: {}]
  %s2 = inlined_call_operand.hbm [shape: s32[1,128], index: 2, kind: input, shape index: {}]
  %s3 = inlined_call_operand.vmem [shape: s32[128,1], index: 3, kind: input, shape index: {}]
  %s4 = inlined_call_operand.vmem [shape: f32[128,128], index: 4, kind: input, shape index: {}]
  %s5 = inlined_call_operand.vmem [shape: f32[128,128], index: 5, kind: input, shape index: {}]
  %s6 = inlined_call_operand.hbm [shape: f32[128,128], index: 6, kind: input, shape index: {}]
  %s7 = inlined_call_operand.vmem [shape: bf16[128,16], index: 7, kind: input, shape index: {}]
  %s8 = inlined_call_operand.vmem [shape: bf16[128,32], index: 8, kind: input, shape index: {}]
  %s9 = inlined_call_operand.vmem [shape: bf16[128,32], index: 9, kind: input, shape index: {}]
  %s10 = inlined_call_operand.hbm [shape: bf16[32,128], index: 10, kind: input, shape index: {}]
  %s11 = inlined_call_operand.hbm [shape: bf16[1,128,128], index: 11, kind: input, shape index: {}]
  %s12 = inlined_call_operand.vmem [shape: f32[32,128], index: 12, kind: input, shape index: {}]
  %s13 = inlined_call_operand.hbm [shape: f32[32,128], index: 13, kind: output, shape index: {}]
  %s14 = sld [smem:[#allocation0]]
  $region82: #{tpu_custom_call.1} parent=0
    _
  %s16 = ssub.s32 1, %s14
  %s17 = scalar_select 0, %s16, %s14
  $region1: #{tpu_custom_call.1} parent=0
    #allocation2 [shape = 'u8[8192]{0}', space=vmem, size = 0x2000, scoped, tag = 'input window, operand 0, single buffered']
    #allocation3 [shape = 's32[1]{0}', space=sflag, size = 0x4, scoped, tag = 'scoped memory for tpu_custom_call.1']
    #allocation4 [shape = 's32[1]{0}', space=sflag, size = 0x4, scoped, tag = 'scoped memory for tpu_custom_call.1']
    #allocation5 [shape = 'u8[512]{0}', space=vmem, size = 0x400, scoped, tag = 'input window, operand 2, single buffered']
    #allocation6 [shape = 's32[1]{0}', space=sflag, size = 0x4, scoped, tag = 'scoped memory for tpu_custom_call.1']
    #allocation7 [shape = 'u8[65536]{0}', space=vmem, size = 0x10000, scoped, tag = 'input window, operand 6, single buffered']
    #allocation8 [shape = 'u8[8192]{0}', space=vmem, size = 0x2000, scoped, tag = 'input window, operand 10, single buffered']
    #allocation9 [shape = 's32[1]{0}', space=sflag, size = 0x4, scoped, tag = 'scoped memory for tpu_custom_call.1']
    #allocation10 [shape = 'u8[32768]{0}', space=vmem, size = 0x8000, scoped, tag = 'input window, operand 11, single buffered']
    #allocation11 [shape = 'u8[16384]{0}', space=vmem, size = 0x4000, scoped, tag = 'output window, operand 0, single buffered']
    %18 = vsyncpa [#allocation3], 0
    %19 = vsyncpa [#allocation6], 0
    %20 = vsyncpa [#allocation9], 0
    %21 = vsyncpa [#allocation4], 0
    // Predicated region
    $region2: #{tpu_custom_call.1} parent=1 // pred_check
      _
    $region3: #{tpu_custom_call.1} parent=1 // pred_check_branch
      %23 = sbr.rel (0) target = $region5
    $region4: #{tpu_custom_call.1} parent=1 // pred_region
      %s25 = ssub.s32 256, 256
      %26 = vsyncadd [#allocation3], %s25
      %s27 = sshll.u32 [#allocation2], 4
      %s28 = int_to_ptr.vmem [resolvable:$true] %s27
      %33 = dma.hbm_to_vmem [thread:$0]  %s0, 256, %s28, [#allocation3], 128, 128, 8
    $region5: #{tpu_custom_call.1} parent=1 // pred_fallthru
      _
    // Predicated region
    $region6: #{tpu_custom_call.1} parent=1 // pred_check
      _
    $region7: #{tpu_custom_call.1} parent=1 // pred_check_branch
      %35 = sbr.rel (0) target = $region9
    $region8: #{tpu_custom_call.1} parent=1 // pred_region
      _
    $region9: #{tpu_custom_call.1} parent=1 // pred_fallthru
      _
    // Predicated region
    $region10: #{tpu_custom_call.1} parent=1 // pred_check
      _
    $region11: #{tpu_custom_call.1} parent=1 // pred_check_branch
      %37 = sbr.rel (0) target = $region13
    $region12: #{tpu_custom_call.1} parent=1 // pred_region
      %s39 = ssub.s32 16, 16
      %40 = vsyncadd [#allocation6], %s39
      %s42 = sshll.u32 [#allocation5], 4
      %s43 = int_to_ptr.vmem [resolvable:$true] %s42
      %45 = dma.hbm_to_vmem [thread:$0]  %s2, 16, %s43, [#allocation6]
    $region13: #{tpu_custom_call.1} parent=1 // pred_fallthru
      _
    // Predicated region
    $region14: #{tpu_custom_call.1} parent=1 // pred_check
      _
    $region15: #{tpu_custom_call.1} parent=1 // pred_check_branch
      %47 = sbr.rel (0) target = $region17
    $region16: #{tpu_custom_call.1} parent=1 // pred_region
      _
    $region17: #{tpu_custom_call.1} parent=1 // pred_fallthru
      _
    // Predicated region
    $region18: #{tpu_custom_call.1} parent=1 // pred_check
      _
    $region19: #{tpu_custom_call.1} parent=1 // pred_check_branch
      %49 = sbr.rel (0) target = $region21
    $region20: #{tpu_custom_call.1} parent=1 // pred_region
      _
    $region21: #{tpu_custom_call.1} parent=1 // pred_fallthru
      _
    // Predicated region
    $region22: #{tpu_custom_call.1} parent=1 // pred_check
      _
    $region23: #{tpu_custom_call.1} parent=1 // pred_check_branch
      %51 = sbr.rel (0) target = $region25
    $region24: #{tpu_custom_call.1} parent=1 // pred_region
      _
    $region25: #{tpu_custom_call.1} parent=1 // pred_fallthru
      _
    // Predicated region
    $region26: #{tpu_custom_call.1} parent=1 // pred_check
      _
    $region27: #{tpu_custom_call.1} parent=1 // pred_check_branch
      %53 = sbr.rel (0) target = $region29
    $region28: #{tpu_custom_call.1} parent=1 // pred_region
      %s55 = ssub.s32 2048, 2048
      %56 = vsyncadd [#allocation6], %s55
      %s57 = sshll.u32 [#allocation7], 4
      %s58 = int_to_ptr.vmem [resolvable:$true] %s57
      %63 = dma.hbm_to_vmem [thread:$0]  %s6, 2048, %s58, [#allocation6], 128, 128, 8
    $region29: #{tpu_custom_call.1} parent=1 // pred_fallthru
      _
    // Predicated region
    $region30: #{tpu_custom_call.1} parent=1 // pred_check
      _
    $region31: #{tpu_custom_call.1} parent=1 // pred_check_branch
      %65 = sbr.rel (0) target = $region33
    $region32: #{tpu_custom_call.1} parent=1 // pred_region
      _
    $region33: #{tpu_custom_call.1} parent=1 // pred_fallthru
      _
    // Predicated region
    $region34: #{tpu_custom_call.1} parent=1 // pred_check
      _
    $region35: #{tpu_custom_call.1} parent=1 // pred_check_branch
      %67 = sbr.rel (0) target = $region37
    $region36: #{tpu_custom_call.1} parent=1 // pred_region
      _
    $region37: #{tpu_custom_call.1} parent=1 // pred_fallthru
      _
    // Predicated region
    $region38: #{tpu_custom_call.1} parent=1 // pred_check
      _
    $region39: #{tpu_custom_call.1} parent=1 // pred_check_branch
      %69 = sbr.rel (0) target = $region41
    $region40: #{tpu_custom_call.1} parent=1 // pred_region
      _
    $region41: #{tpu_custom_call.1} parent=1 // pred_fallthru
      _
    // Predicated region
    $region42: #{tpu_custom_call.1} parent=1 // pred_check
      _
    $region43: #{tpu_custom_call.1} parent=1 // pred_check_branch
      %71 = sbr.rel (0) target = $region45
    $region44: #{tpu_custom_call.1} parent=1 // pred_region
      %s73 = ssub.s32 256, 256
      %74 = vsyncadd [#allocation9], %s73
      %s75 = sshll.u32 [#allocation8], 4
      %s76 = int_to_ptr.vmem [resolvable:$true] %s75
      %81 = dma.hbm_to_vmem [thread:$0]  %s10, 256, %s76, [#allocation9], 64, 64, 4
    $region45: #{tpu_custom_call.1} parent=1 // pred_fallthru
      _
    // Predicated region
    $region46: #{tpu_custom_call.1} parent=1 // pred_check
      _
    $region47: #{tpu_custom_call.1} parent=1 // pred_check_branch
      %83 = sbr.rel (0) target = $region49
    $region48: #{tpu_custom_call.1} parent=1 // pred_region
      %s85 = ssub.s32 1024, 1024
      %86 = vsyncadd [#allocation9], %s85
      %s87 = sshll.u32 [#allocation10], 4
      %s88 = int_to_ptr.vmem [resolvable:$true] %s87
      %93 = dma.hbm_to_vmem [thread:$0]  %s11, 1024, %s88, [#allocation9], 64, 64, 4
    $region49: #{tpu_custom_call.1} parent=1 // pred_fallthru
      _
    // Predicated region
    $region50: #{tpu_custom_call.1} parent=1 // pred_check
      _
    $region51: #{tpu_custom_call.1} parent=1 // pred_check_branch
      %95 = sbr.rel (0) target = $region53
    $region52: #{tpu_custom_call.1} parent=1 // pred_region
      _
    $region53: #{tpu_custom_call.1} parent=1 // pred_fallthru
      _
    // Predicated region
    $region54: #{tpu_custom_call.1} parent=1 // pred_check
      _
    $region55: #{tpu_custom_call.1} parent=1 // pred_check_branch
      %97 = sbr.rel (0) target = $region57
    $region56: #{tpu_custom_call.1} parent=1 // pred_region
      %98 = dma.done [#allocation3], 256
    $region57: #{tpu_custom_call.1} parent=1 // pred_fallthru
      _
    // Predicated region
    $region58: #{tpu_custom_call.1} parent=1 // pred_check
      _
    $region59: #{tpu_custom_call.1} parent=1 // pred_check_branch
      %100 = sbr.rel (0) target = $region61
    $region60: #{tpu_custom_call.1} parent=1 // pred_region
      %101 = dma.done [#allocation6], 16
    $region61: #{tpu_custom_call.1} parent=1 // pred_fallthru
      _
    // Predicated region
    $region62: #{tpu_custom_call.1} parent=1 // pred_check
      _
    $region63: #{tpu_custom_call.1} parent=1 // pred_check_branch
      %103 = sbr.rel (0) target = $region65
    $region64: #{tpu_custom_call.1} parent=1 // pred_region
      %104 = dma.done [#allocation6], 2048
    $region65: #{tpu_custom_call.1} parent=1 // pred_fallthru
      _
    // Predicated region
    $region66: #{tpu_custom_call.1} parent=1 // pred_check
      _
    $region67: #{tpu_custom_call.1} parent=1 // pred_check_branch
      %106 = sbr.rel (0) target = $region69
    $region68: #{tpu_custom_call.1} parent=1 // pred_region
      %107 = dma.done [#allocation9], 256
    $region69: #{tpu_custom_call.1} parent=1 // pred_fallthru
      _
    // Predicated region
    $region70: #{tpu_custom_call.1} parent=1 // pred_check
      _
    $region71: #{tpu_custom_call.1} parent=1 // pred_check_branch
      %109 = sbr.rel (0) target = $region73
    $region72: #{tpu_custom_call.1} parent=1 // pred_region
      %110 = dma.done [#allocation9], 1024
    $region73: #{tpu_custom_call.1} parent=1 // pred_fallthru
      _
    %v112 = vld [vmem:[%s1] sm:$0xf]
    %v113 = vld [vmem:[%s1 + $0x4] sm:$0xf]
    %v114 = vld [vmem:[%s1 + $0x8] sm:$0xf]
    %v115 = vld [vmem:[%s1 + $0xc] sm:$0xf]
    %v116 = vld [vmem:[%s1 + $0x10] sm:$0xf]
    %v117 = vld [vmem:[%s1 + $0x14] sm:$0xf]
    %v118 = vld [vmem:[%s1 + $0x18] sm:$0xf]
    %v119 = vld [vmem:[%s1 + $0x1c] sm:$0xf]
    %v120 = vld [vmem:[%s1 + $0x20] sm:$0xf]
    %v121 = vld [vmem:[%s1 + $0x24] sm:$0xf]
    %v122 = vld [vmem:[%s1 + $0x28] sm:$0xf]
    %v123 = vld [vmem:[%s1 + $0x2c] sm:$0xf]
    %v124 = vld [vmem:[%s1 + $0x30] sm:$0xf]
    %v125 = vld [vmem:[%s1 + $0x34] sm:$0xf]
    %v126 = vld [vmem:[%s1 + $0x38] sm:$0xf]
    %v127 = vld [vmem:[%s1 + $0x3c] sm:$0xf]
    %v128 = vld [vmem:[#allocation8] sm:$0xf]
    %v129 = vld [vmem:[#allocation8 + $0x4] sm:$0xf]
    %v130 = vld [vmem:[#allocation8 + $0x8] sm:$0xf]
    %v131 = vld [vmem:[#allocation8 + $0xc] sm:$0xf]
    %v132 = vld [vmem:[%s3] sm:$0xff]
    %v133 = vld [vmem:[%s3 + $0x8] sm:$0xff]
    %v134 = vld [vmem:[%s3 + $0x10] sm:$0xff]
    %v135 = vld [vmem:[%s3 + $0x18] sm:$0xff]
    %v136 = vld [vmem:[%s3 + $0x20] sm:$0xff]
    %v137 = vld [vmem:[%s3 + $0x28] sm:$0xff]
    %v138 = vld [vmem:[%s3 + $0x30] sm:$0xff]
    %v139 = vld [vmem:[%s3 + $0x38] sm:$0xff]
    %v140 = vld [vmem:[%s3 + $0x40] sm:$0xff]
    %v141 = vld [vmem:[%s3 + $0x48] sm:$0xff]
    %v142 = vld [vmem:[%s3 + $0x50] sm:$0xff]
    %v143 = vld [vmem:[%s3 + $0x58] sm:$0xff]
    %v144 = vld [vmem:[%s3 + $0x60] sm:$0xff]
    %v145 = vld [vmem:[%s3 + $0x68] sm:$0xff]
    %v146 = vld [vmem:[%s3 + $0x70] sm:$0xff]
    %v147 = vld [vmem:[%s3 + $0x78] sm:$0xff]
    %148 = vset.pattern.permute.xlu0 0
    %149 = vperm.xlu0 %148, %v132
    %v150 = vpop.permute.xlu0 %149
    %151 = vset.pattern.permute.xlu0 0
    %152 = vperm.xlu0 %151, %v133
    %v153 = vpop.permute.xlu0 %152
    %154 = vset.pattern.permute.xlu0 0
    %155 = vperm.xlu0 %154, %v134
    %v156 = vpop.permute.xlu0 %155
    %157 = vset.pattern.permute.xlu0 0
    %158 = vperm.xlu0 %157, %v135
    %v159 = vpop.permute.xlu0 %158
    %160 = vset.pattern.permute.xlu0 0
    %161 = vperm.xlu0 %160, %v136
    %v162 = vpop.permute.xlu0 %161
    %163 = vset.pattern.permute.xlu0 0
    %164 = vperm.xlu0 %163, %v137
    %v165 = vpop.permute.xlu0 %164
    %166 = vset.pattern.permute.xlu0 0
    %167 = vperm.xlu0 %166, %v138
    %v168 = vpop.permute.xlu0 %167
    %169 = vset.pattern.permute.xlu0 0
    %170 = vperm.xlu0 %169, %v139
    %v171 = vpop.permute.xlu0 %170
    %172 = vset.pattern.permute.xlu0 0
    %173 = vperm.xlu0 %172, %v140
    %v174 = vpop.permute.xlu0 %173
    %175 = vset.pattern.permute.xlu0 0
    %176 = vperm.xlu0 %175, %v141
    %v177 = vpop.permute.xlu0 %176
    %178 = vset.pattern.permute.xlu0 0
    %179 = vperm.xlu0 %178, %v142
    %v180 = vpop.permute.xlu0 %179
    %181 = vset.pattern.permute.xlu0 0
    %182 = vperm.xlu0 %181, %v143
    %v183 = vpop.permute.xlu0 %182
    %184 = vset.pattern.permute.xlu0 0
    %185 = vperm.xlu0 %184, %v144
    %v186 = vpop.permute.xlu0 %185
    %187 = vset.pattern.permute.xlu0 0
    %188 = vperm.xlu0 %187, %v145
    %v189 = vpop.permute.xlu0 %188
    %190 = vset.pattern.permute.xlu0 0
    %191 = vperm.xlu0 %190, %v146
    %v192 = vpop.permute.xlu0 %191
    %193 = vset.pattern.permute.xlu0 0
    %194 = vperm.xlu0 %193, %v147
    %v195 = vpop.permute.xlu0 %194
    %v196 = vld [vmem:[#allocation5] sm:$0x1]
    %v197 = vlaneseq
    %v198 = vshrl.u32 %v197, 7
    %v199 = vsub.s32 0, %v198
    %v200 = vrot.slane %v196, %v199
    %vm201 = vcmp.eq.s32.totalorder %v150, %v200
    %vm202 = vcmp.eq.s32.totalorder %v153, %v200
    %vm203 = vcmp.eq.s32.totalorder %v156, %v200
    %vm204 = vcmp.eq.s32.totalorder %v159, %v200
    %vm205 = vcmp.eq.s32.totalorder %v162, %v200
    %vm206 = vcmp.eq.s32.totalorder %v165, %v200
    %vm207 = vcmp.eq.s32.totalorder %v168, %v200
    %vm208 = vcmp.eq.s32.totalorder %v171, %v200
    %vm209 = vcmp.eq.s32.totalorder %v174, %v200
    %vm210 = vcmp.eq.s32.totalorder %v177, %v200
    %vm211 = vcmp.eq.s32.totalorder %v180, %v200
    %vm212 = vcmp.eq.s32.totalorder %v183, %v200
    %vm213 = vcmp.eq.s32.totalorder %v186, %v200
    %vm214 = vcmp.eq.s32.totalorder %v189, %v200
    %vm215 = vcmp.eq.s32.totalorder %v192, %v200
    %vm216 = vcmp.eq.s32.totalorder %v195, %v200
    %v217 = vsel %vm201, 1, 0
    %v218 = vsel %vm202, 1, 0
    %v219 = vsel %vm203, 1, 0
    %v220 = vsel %vm204, 1, 0
    %v221 = vsel %vm205, 1, 0
    %v222 = vsel %vm206, 1, 0
    %v223 = vsel %vm207, 1, 0
    %v224 = vsel %vm208, 1, 0
    %v225 = vsel %vm209, 1, 0
    %v226 = vsel %vm210, 1, 0
    %v227 = vsel %vm211, 1, 0
    %v228 = vsel %vm212, 1, 0
    %v229 = vsel %vm213, 1, 0
    %v230 = vsel %vm214, 1, 0
    %v231 = vsel %vm215, 1, 0
    %v232 = vsel %vm216, 1, 0
    %v233 = vcvt.s32.f32 %v217
    %v234 = vcvt.s32.f32 %v218
    %v235 = vcvt.s32.f32 %v219
    %v236 = vcvt.s32.f32 %v220
    %v237 = vcvt.s32.f32 %v221
    %v238 = vcvt.s32.f32 %v222
    %v239 = vcvt.s32.f32 %v223
    %v240 = vcvt.s32.f32 %v224
    %v241 = vcvt.s32.f32 %v225
    %v242 = vcvt.s32.f32 %v226
    %v243 = vcvt.s32.f32 %v227
    %v244 = vcvt.s32.f32 %v228
    %v245 = vcvt.s32.f32 %v229
    %v246 = vcvt.s32.f32 %v230
    %v247 = vcvt.s32.f32 %v231
    %v248 = vcvt.s32.f32 %v232
    %v249 = vld [vmem:[#allocation2] sm:$0xff]
    %v250 = vld [vmem:[#allocation2 + $0x8] sm:$0xff]
    %v251 = vpack.c.bf16 %v250, %v249
    %v268 = vunpack.c.l.b16 %v112
    %v269 = vunpack.c.l.b16 %v113
    %v270 = vunpack.c.l.b16 %v114
    %v271 = vunpack.c.l.b16 %v115
    %v272 = vunpack.c.l.b16 %v116
    %v273 = vunpack.c.l.b16 %v117
    %v274 = vunpack.c.l.b16 %v118
    %v275 = vunpack.c.l.b16 %v119
    %v276 = vunpack.c.l.b16 %v120
    %v277 = vunpack.c.l.b16 %v121
    %v278 = vunpack.c.l.b16 %v122
    %v279 = vunpack.c.l.b16 %v123
    %v280 = vunpack.c.l.b16 %v124
    %v281 = vunpack.c.l.b16 %v125
    %v282 = vunpack.c.l.b16 %v126
    %v283 = vunpack.c.l.b16 %v127
    %v284 = vpack.c.b16 %v269, %v268
    %v285 = vpack.c.b16 %v271, %v270
    %v286 = vpack.c.b16 %v273, %v272
    %v287 = vpack.c.b16 %v275, %v274
    %v288 = vpack.c.b16 %v277, %v276
    %v289 = vpack.c.b16 %v279, %v278
    %v290 = vpack.c.b16 %v281, %v280
    %v291 = vpack.c.b16 %v283, %v282
    %300 = vmatprep.subr.bf16.mxu0 0
    %301 = vmatpush1.bf16.msra.mxu0 %v291
    %302 = vmatprep.subr.bf16.mxu0 0
    %303 = vmatpush1.bf16.msra.mxu0 %v290
    %304 = vmatprep.subr.bf16.mxu0 0
    %305 = vmatpush1.bf16.msra.mxu0 %v289
    %306 = vmatprep.subr.bf16.mxu0 0
    %307 = vmatpush1.bf16.msra.mxu0 %v288
    %308 = vmatprep.subr.bf16.mxu0 0
    %309 = vmatpush1.bf16.msra.mxu0 %v287
    %310 = vmatprep.subr.bf16.mxu0 0
    %311 = vmatpush1.bf16.msra.mxu0 %v286
    %312 = vmatprep.subr.bf16.mxu0 0
    %313 = vmatpush1.bf16.msra.mxu0 %v285
    %314 = vmatprep.subr.bf16.mxu0 0
    %315 = vmatpush1.bf16.msra.mxu0 %v284
    %316 = vmatprep.subr.bf16.mxu0 0
    %317 = vmatpush2.bf16.msra.mxu0 0
    %318 = vmatprep.subr.bf16.mxu0 0
    %319 = vmatpush2.bf16.msra.mxu0 0
    %320 = vmatprep.subr.bf16.mxu0 0
    %321 = vmatpush2.bf16.msra.mxu0 0
    %322 = vmatprep.subr.bf16.mxu0 0
    %323 = vmatpush2.bf16.msra.mxu0 0
    %324 = vmatprep.subr.bf16.mxu0 0
    %325 = vmatpush2.bf16.msra.mxu0 0
    %326 = vmatprep.subr.bf16.mxu0 0
    %327 = vmatpush2.bf16.msra.mxu0 0
    %328 = vmatprep.subr.bf16.mxu0 0
    %329 = vmatpush2.bf16.msra.mxu0 0
    %330 = vmatprep.subr.bf16.mxu0 0
    %331 = vmatpush2.bf16.msra.mxu0 0
    %332 = vmatprep.mubr.bf16.mxu0 0
    %333 = vmatmul.mubr.bf16.gmra.mxu0 %v251
    %v334 = vpop.f32.mrf.mxu0
    %v335 = vadd.f32 0.0, %v334
    %v336 = vpop.f32.mrf.mxu0
    %v337 = vpop.f32.mrf.mxu0
    %v338 = vadd.f32 0.0, %v337
    %v339 = vpop.f32.mrf.mxu0
    %340 = vdwg.mxu0
    %v341 = vld [vmem:[%s7] sm:$0xf]
    %v342 = vld [vmem:[%s7 + $0x4] sm:$0xf]
    %v343 = vld [vmem:[%s7 + $0x8] sm:$0xf]
    %v344 = vld [vmem:[%s7 + $0xc] sm:$0xf]
    %v345 = vld [vmem:[%s7 + $0x10] sm:$0xf]
    %v346 = vld [vmem:[%s7 + $0x14] sm:$0xf]
    %v347 = vld [vmem:[%s7 + $0x18] sm:$0xf]
    %v348 = vld [vmem:[%s7 + $0x1c] sm:$0xf]
    %v349 = vld [vmem:[%s7 + $0x20] sm:$0xf]
    %v350 = vld [vmem:[%s7 + $0x24] sm:$0xf]
    %v351 = vld [vmem:[%s7 + $0x28] sm:$0xf]
    %v352 = vld [vmem:[%s7 + $0x2c] sm:$0xf]
    %v353 = vld [vmem:[%s7 + $0x30] sm:$0xf]
    %v354 = vld [vmem:[%s7 + $0x34] sm:$0xf]
    %v355 = vld [vmem:[%s7 + $0x38] sm:$0xf]
    %v356 = vld [vmem:[%s7 + $0x3c] sm:$0xf]
    %v357 = vpack.c.bf16 %v338, %v335
    %v358 = vld [vmem:[%s4] sm:$0xff]
    %v359 = vld [vmem:[%s4 + $0x8] sm:$0xff]
    %v360 = vld [vmem:[%s4 + $0x10] sm:$0xff]
    %v361 = vld [vmem:[%s4 + $0x18] sm:$0xff]
    %v362 = vld [vmem:[%s4 + $0x20] sm:$0xff]
    %v363 = vld [vmem:[%s4 + $0x28] sm:$0xff]
    %v364 = vld [vmem:[%s4 + $0x30] sm:$0xff]
    %v365 = vld [vmem:[%s4 + $0x38] sm:$0xff]
    %v366 = vld [vmem:[%s4 + $0x40] sm:$0xff]
    %v367 = vld [vmem:[%s4 + $0x48] sm:$0xff]
    %v368 = vld [vmem:[%s4 + $0x50] sm:$0xff]
    %v369 = vld [vmem:[%s4 + $0x58] sm:$0xff]
    %v370 = vld [vmem:[%s4 + $0x60] sm:$0xff]
    %v371 = vld [vmem:[%s4 + $0x68] sm:$0xff]
    %v372 = vld [vmem:[%s4 + $0x70] sm:$0xff]
    %v373 = vld [vmem:[%s4 + $0x78] sm:$0xff]
    %v390 = vunpack.c.l.b16 %v341
    %v391 = vunpack.c.l.b16 %v342
    %v392 = vunpack.c.l.b16 %v343
    %v393 = vunpack.c.l.b16 %v344
    %v394 = vunpack.c.l.b16 %v345
    %v395 = vunpack.c.l.b16 %v346
    %v396 = vunpack.c.l.b16 %v347
    %v397 = vunpack.c.l.b16 %v348
    %v398 = vunpack.c.l.b16 %v349
    %v399 = vunpack.c.l.b16 %v350
    %v400 = vunpack.c.l.b16 %v351
    %v401 = vunpack.c.l.b16 %v352
    %v402 = vunpack.c.l.b16 %v353
    %v403 = vunpack.c.l.b16 %v354
    %v404 = vunpack.c.l.b16 %v355
    %v405 = vunpack.c.l.b16 %v356
    %v406 = vpack.c.b16 %v391, %v390
    %v407 = vpack.c.b16 %v393, %v392
    %v408 = vpack.c.b16 %v395, %v394
    %v409 = vpack.c.b16 %v397, %v396
    %v410 = vpack.c.b16 %v399, %v398
    %v411 = vpack.c.b16 %v401, %v400
    %v412 = vpack.c.b16 %v403, %v402
    %v413 = vpack.c.b16 %v405, %v404
    %vm414 = vcmask 130048
    %v416 = vsel %vm414, %v406, 0
    %v419 = vsel %vm414, %v407, 0
    %v422 = vsel %vm414, %v408, 0
    %v425 = vsel %vm414, %v409, 0
    %v428 = vsel %vm414, %v410, 0
    %v431 = vsel %vm414, %v411, 0
    %v434 = vsel %vm414, %v412, 0
    %v437 = vsel %vm414, %v413, 0
    %439 = vmatprep.subr.bf16.mxu0 0
    %440 = vmatpush1.bf16.msra.mxu0 0
    %441 = vmatprep.subr.bf16.mxu0 0
    %442 = vmatpush1.bf16.msra.mxu0 0
    %443 = vmatprep.subr.bf16.mxu0 0
    %444 = vmatpush1.bf16.msra.mxu0 0
    %445 = vmatprep.subr.bf16.mxu0 0
    %446 = vmatpush1.bf16.msra.mxu0 0
    %447 = vmatprep.subr.bf16.mxu0 0
    %448 = vmatpush1.bf16.msra.mxu0 0
    %449 = vmatprep.subr.bf16.mxu0 0
    %450 = vmatpush1.bf16.msra.mxu0 0
    %451 = vmatprep.subr.bf16.mxu0 0
    %452 = vmatpush1.bf16.msra.mxu0 0
    %453 = vmatprep.subr.bf16.mxu0 0
    %454 = vmatpush1.bf16.msra.mxu0 %v357
    %455 = vmatprep.subr.bf16.mxu0 0
    %456 = vmatpush2.bf16.msra.mxu0 0
    %457 = vmatprep.subr.bf16.mxu0 0
    %458 = vmatpush2.bf16.msra.mxu0 0
    %459 = vmatprep.subr.bf16.mxu0 0
    %460 = vmatpush2.bf16.msra.mxu0 0
    %461 = vmatprep.subr.bf16.mxu0 0
    %462 = vmatpush2.bf16.msra.mxu0 0
    %463 = vmatprep.subr.bf16.mxu0 0
    %464 = vmatpush2.bf16.msra.mxu0 0
    %465 = vmatprep.subr.bf16.mxu0 0
    %466 = vmatpush2.bf16.msra.mxu0 0
    %467 = vmatprep.subr.bf16.mxu0 0
    %468 = vmatpush2.bf16.msra.mxu0 0
    %469 = vmatprep.subr.bf16.mxu0 0
    %470 = vmatpush2.bf16.msra.mxu0 0
    %471 = vmatprep.mubr.bf16.mxu0 0
    %472 = vmatmul.mubr.bf16.gmra.mxu0 %v416
    %v473 = vpop.f32.mrf.mxu0
    %v474 = vadd.f32 %v358, %v473
    %v475 = vpop.f32.mrf.mxu0
    %v476 = vpop.f32.mrf.mxu0
    %v477 = vadd.f32 %v359, %v476
    %v478 = vpop.f32.mrf.mxu0
    %479 = vmatprep.mubr.bf16.mxu0 0
    %480 = vmatmul.mubr.bf16.gmra.mxu0 %v419
    %v481 = vpop.f32.mrf.mxu0
    %v482 = vadd.f32 %v360, %v481
    %v483 = vpop.f32.mrf.mxu0
    %v484 = vpop.f32.mrf.mxu0
    %v485 = vadd.f32 %v361, %v484
    %v486 = vpop.f32.mrf.mxu0
    %487 = vmatprep.mubr.bf16.mxu0 0
    %488 = vmatmul.mubr.bf16.gmra.mxu0 %v422
    %v489 = vpop.f32.mrf.mxu0
    %v490 = vadd.f32 %v362, %v489
    %v491 = vpop.f32.mrf.mxu0
    %v492 = vpop.f32.mrf.mxu0
    %v493 = vadd.f32 %v363, %v492
    %v494 = vpop.f32.mrf.mxu0
    %495 = vmatprep.mubr.bf16.mxu0 0
    %496 = vmatmul.mubr.bf16.gmra.mxu0 %v425
    %v497 = vpop.f32.mrf.mxu0
    %v498 = vadd.f32 %v364, %v497
    %v499 = vpop.f32.mrf.mxu0
    %v500 = vpop.f32.mrf.mxu0
    %v501 = vadd.f32 %v365, %v500
    %v502 = vpop.f32.mrf.mxu0
    %503 = vmatprep.mubr.bf16.mxu0 0
    %504 = vmatmul.mubr.bf16.gmra.mxu0 %v428
    %v505 = vpop.f32.mrf.mxu0
    %v506 = vadd.f32 %v366, %v505
    %v507 = vpop.f32.mrf.mxu0
    %v508 = vpop.f32.mrf.mxu0
    %v509 = vadd.f32 %v367, %v508
    %v510 = vpop.f32.mrf.mxu0
    %511 = vmatprep.mubr.bf16.mxu0 0
    %512 = vmatmul.mubr.bf16.gmra.mxu0 %v431
    %v513 = vpop.f32.mrf.mxu0
    %v514 = vadd.f32 %v368, %v513
    %v515 = vpop.f32.mrf.mxu0
    %v516 = vpop.f32.mrf.mxu0
    %v517 = vadd.f32 %v369, %v516
    %v518 = vpop.f32.mrf.mxu0
    %519 = vmatprep.mubr.bf16.mxu0 0
    %520 = vmatmul.mubr.bf16.gmra.mxu0 %v434
    %v521 = vpop.f32.mrf.mxu0
    %v522 = vadd.f32 %v370, %v521
    %v523 = vpop.f32.mrf.mxu0
    %v524 = vpop.f32.mrf.mxu0
    %v525 = vadd.f32 %v371, %v524
    %v526 = vpop.f32.mrf.mxu0
    %527 = vmatprep.mubr.bf16.mxu0 0
    %528 = vmatmul.mubr.bf16.gmra.mxu0 %v437
    %v529 = vpop.f32.mrf.mxu0
    %v530 = vadd.f32 %v372, %v529
    %v531 = vpop.f32.mrf.mxu0
    %v532 = vpop.f32.mrf.mxu0
    %v533 = vadd.f32 %v373, %v532
    %v534 = vpop.f32.mrf.mxu0
    %535 = vdwg.mxu0
    %v536 = vmul.f32 %v474, %v233
    %v537 = vmul.f32 %v477, %v234
    %v538 = vmul.f32 %v482, %v235
    %v539 = vmul.f32 %v485, %v236
    %v540 = vmul.f32 %v490, %v237
    %v541 = vmul.f32 %v493, %v238
    %v542 = vmul.f32 %v498, %v239
    %v543 = vmul.f32 %v501, %v240
    %v544 = vmul.f32 %v506, %v241
    %v545 = vmul.f32 %v509, %v242
    %v546 = vmul.f32 %v514, %v243
    %v547 = vmul.f32 %v517, %v244
    %v548 = vmul.f32 %v522, %v245
    %v549 = vmul.f32 %v525, %v246
    %v550 = vmul.f32 %v530, %v247
    %v551 = vmul.f32 %v533, %v248
    %v552 = vpack.c.bf16 %v537, %v536
    %v553 = vpack.c.bf16 %v539, %v538
    %v554 = vpack.c.bf16 %v541, %v540
    %v555 = vpack.c.bf16 %v543, %v542
    %v556 = vpack.c.bf16 %v545, %v544
    %v557 = vpack.c.bf16 %v547, %v546
    %v558 = vpack.c.bf16 %v549, %v548
    %v559 = vpack.c.bf16 %v551, %v550
    %v564 = vunpack.c.l.b16 %v128
    %v565 = vunpack.c.l.b16 %v129
    %v566 = vunpack.c.l.b16 %v130
    %v567 = vunpack.c.l.b16 %v131
    %v568 = vpack.c.b16 %v565, %v564
    %v569 = vpack.c.b16 %v567, %v566
    %572 = vmatprep.subr.bf16.mxu0 0
    %573 = vmatpush1.bf16.msra.mxu0 %v559
    %574 = vmatprep.subr.bf16.mxu0 0
    %575 = vmatpush1.bf16.msra.mxu0 %v558
    %576 = vmatprep.subr.bf16.mxu0 0
    %577 = vmatpush1.bf16.msra.mxu0 %v557
    %578 = vmatprep.subr.bf16.mxu0 0
    %579 = vmatpush1.bf16.msra.mxu0 %v556
    %580 = vmatprep.subr.bf16.mxu0 0
    %581 = vmatpush1.bf16.msra.mxu0 %v555
    %582 = vmatprep.subr.bf16.mxu0 0
    %583 = vmatpush1.bf16.msra.mxu0 %v554
    %584 = vmatprep.subr.bf16.mxu0 0
    %585 = vmatpush1.bf16.msra.mxu0 %v553
    %586 = vmatprep.subr.bf16.mxu0 0
    %587 = vmatpush1.bf16.msra.mxu0 %v552
    %588 = vmatprep.subr.bf16.mxu0 0
    %589 = vmatpush2.bf16.msra.mxu0 0
    %590 = vmatprep.subr.bf16.mxu0 0
    %591 = vmatpush2.bf16.msra.mxu0 0
    %592 = vmatprep.subr.bf16.mxu0 0
    %593 = vmatpush2.bf16.msra.mxu0 0
    %594 = vmatprep.subr.bf16.mxu0 0
    %595 = vmatpush2.bf16.msra.mxu0 0
    %596 = vmatprep.subr.bf16.mxu0 0
    %597 = vmatpush2.bf16.msra.mxu0 0
    %598 = vmatprep.subr.bf16.mxu0 0
    %599 = vmatpush2.bf16.msra.mxu0 0
    %600 = vmatprep.subr.bf16.mxu0 0
    %601 = vmatpush2.bf16.msra.mxu0 0
    %602 = vmatprep.subr.bf16.mxu0 0
    %603 = vmatpush2.bf16.msra.mxu0 0
    %604 = vmatprep.mubr.bf16.mxu0 0
    %605 = vmatmul.mubr.bf16.gmra.mxu0 %v568
    %v606 = vpop.f32.mrf.mxu0
    %v607 = vadd.f32 0.0, %v606
    %v608 = vpop.f32.mrf.mxu0
    %v609 = vpop.f32.mrf.mxu0
    %v610 = vadd.f32 0.0, %v609
    %v611 = vpop.f32.mrf.mxu0
    %612 = vmatprep.mubr.bf16.mxu0 0
    %613 = vmatmul.mubr.bf16.gmra.mxu0 %v569
    %v614 = vpop.f32.mrf.mxu0
    %v615 = vadd.f32 0.0, %v614
    %v616 = vpop.f32.mrf.mxu0
    %v617 = vpop.f32.mrf.mxu0
    %v618 = vadd.f32 0.0, %v617
    %v619 = vpop.f32.mrf.mxu0
    %620 = vdwg.mxu0
    %621 = vmatprep.subr.mxu0 0.0
    %622 = vmatpush1.msra.mxu0 1.0
    %623 = vmatprep.subr.mxu0 0.0
    %624 = vmatpush1.msra.mxu0 1.0
    %625 = vmatprep.subr.mxu0 0.0
    %626 = vmatpush1.msra.mxu0 1.0
    %627 = vmatprep.subr.mxu0 0.0
    %628 = vmatpush1.msra.mxu0 1.0
    %629 = vmatprep.subr.mxu0 0.0
    %630 = vmatpush1.msra.mxu0 1.0
    %631 = vmatprep.subr.mxu0 0.0
    %632 = vmatpush1.msra.mxu0 1.0
    %633 = vmatprep.subr.mxu0 0.0
    %634 = vmatpush1.msra.mxu0 1.0
    %635 = vmatprep.subr.mxu0 0.0
    %636 = vmatpush1.msra.mxu0 1.0
    %637 = vmatprep.subr.mxu0 0.0
    %638 = vmatpush1.msra.mxu0 1.0
    %639 = vmatprep.subr.mxu0 0.0
    %640 = vmatpush1.msra.mxu0 1.0
    %641 = vmatprep.subr.mxu0 0.0
    %642 = vmatpush1.msra.mxu0 1.0
    %643 = vmatprep.subr.mxu0 0.0
    %644 = vmatpush1.msra.mxu0 1.0
    %645 = vmatprep.subr.mxu0 0.0
    %646 = vmatpush1.msra.mxu0 1.0
    %647 = vmatprep.subr.mxu0 0.0
    %648 = vmatpush1.msra.mxu0 1.0
    %649 = vmatprep.subr.mxu0 0.0
    %650 = vmatpush1.msra.mxu0 1.0
    %651 = vmatprep.subr.mxu0 0.0
    %652 = vmatpush1.msra.mxu0 1.0
    %653 = vmatprep.subr.mxu0 0.0
    %654 = vmatpush2.msra.mxu0 0.0
    %655 = vmatprep.subr.mxu0 0.0
    %656 = vmatpush2.msra.mxu0 0.0
    %657 = vmatprep.subr.mxu0 0.0
    %658 = vmatpush2.msra.mxu0 0.0
    %659 = vmatprep.subr.mxu0 0.0
    %660 = vmatpush2.msra.mxu0 0.0
    %661 = vmatprep.subr.mxu0 0.0
    %662 = vmatpush2.msra.mxu0 0.0
    %663 = vmatprep.subr.mxu0 0.0
    %664 = vmatpush2.msra.mxu0 0.0
    %665 = vmatprep.subr.mxu0 0.0
    %666 = vmatpush2.msra.mxu0 0.0
    %667 = vmatprep.subr.mxu0 0.0
    %668 = vmatpush2.msra.mxu0 0.0
    %669 = vmatprep.subr.mxu0 0.0
    %670 = vmatpush2.msra.mxu0 0.0
    %671 = vmatprep.subr.mxu0 0.0
    %672 = vmatpush2.msra.mxu0 0.0
    %673 = vmatprep.subr.mxu0 0.0
    %674 = vmatpush2.msra.mxu0 0.0
    %675 = vmatprep.subr.mxu0 0.0
    %676 = vmatpush2.msra.mxu0 0.0
    %677 = vmatprep.subr.mxu0 0.0
    %678 = vmatpush2.msra.mxu0 0.0
    %679 = vmatprep.subr.mxu0 0.0
    %680 = vmatpush2.msra.mxu0 0.0
    %681 = vmatprep.subr.mxu0 0.0
    %682 = vmatpush2.msra.mxu0 0.0
    %683 = vmatprep.subr.mxu0 0.0
    %684 = vmatpush2.msra.mxu0 0.0
    %685 = vmatprep.mubr.f32.mxu0 0.0
    %686 = vmatmul.mubr.f32.gmra.mxu0 %v607
    %v687 = vpop.f32.mrf.mxu0
    %v688 = vadd.f32 0.0, %v687
    %v689 = vpop.f32.mrf.mxu0
    %690 = vmatprep.mubr.f32.mxu0 0.0
    %691 = vmatmul.mubr.f32.gmra.mxu0 %v610
    %v692 = vpop.f32.mrf.mxu0
    %v693 = vadd.f32 0.0, %v692
    %v694 = vpop.f32.mrf.mxu0
    %695 = vmatprep.mubr.f32.mxu0 0.0
    %696 = vmatmul.mubr.f32.gmra.mxu0 %v615
    %v697 = vpop.f32.mrf.mxu0
    %v698 = vadd.f32 0.0, %v697
    %v699 = vpop.f32.mrf.mxu0
    %700 = vmatprep.mubr.f32.mxu0 0.0
    %701 = vmatmul.mubr.f32.gmra.mxu0 %v618
    %v702 = vpop.f32.mrf.mxu0
    %v703 = vadd.f32 0.0, %v702
    %v704 = vpop.f32.mrf.mxu0
    %705 = vdwg.mxu0
    %v706 = vmul.f32 %v688, 0.0078125
    %v707 = vmul.f32 %v693, 0.0078125
    %v708 = vmul.f32 %v698, 0.0078125
    %v709 = vmul.f32 %v703, 0.0078125
    %711 = vset.pattern.permute.xlu0 0
    %712 = vperm.xlu0 %711, %v706
    %v713 = vpop.permute.xlu0 %712
    %716 = vset.pattern.permute.xlu0 0
    %717 = vperm.xlu0 %716, %v707
    %v718 = vpop.permute.xlu0 %717
    %721 = vset.pattern.permute.xlu0 0
    %722 = vperm.xlu0 %721, %v708
    %v723 = vpop.permute.xlu0 %722
    %726 = vset.pattern.permute.xlu0 0
    %727 = vperm.xlu0 %726, %v709
    %v728 = vpop.permute.xlu0 %727
    %v730 = vsub.f32 %v607, %v713
    %v731 = vsub.f32 %v610, %v718
    %v732 = vsub.f32 %v615, %v723
    %v733 = vsub.f32 %v618, %v728
    %v734 = vmul.f32 %v730, %v730
    %v735 = vmul.f32 %v731, %v731
    %v736 = vmul.f32 %v732, %v732
    %v737 = vmul.f32 %v733, %v733
    %738 = vmatprep.subr.mxu0 0.0
    %739 = vmatpush1.msra.mxu0 1.0
    %740 = vmatprep.subr.mxu0 0.0
    %741 = vmatpush1.msra.mxu0 1.0
    %742 = vmatprep.subr.mxu0 0.0
    %743 = vmatpush1.msra.mxu0 1.0
    %744 = vmatprep.subr.mxu0 0.0
    %745 = vmatpush1.msra.mxu0 1.0
    %746 = vmatprep.subr.mxu0 0.0
    %747 = vmatpush1.msra.mxu0 1.0
    %748 = vmatprep.subr.mxu0 0.0
    %749 = vmatpush1.msra.mxu0 1.0
    %750 = vmatprep.subr.mxu0 0.0
    %751 = vmatpush1.msra.mxu0 1.0
    %752 = vmatprep.subr.mxu0 0.0
    %753 = vmatpush1.msra.mxu0 1.0
    %754 = vmatprep.subr.mxu0 0.0
    %755 = vmatpush1.msra.mxu0 1.0
    %756 = vmatprep.subr.mxu0 0.0
    %757 = vmatpush1.msra.mxu0 1.0
    %758 = vmatprep.subr.mxu0 0.0
    %759 = vmatpush1.msra.mxu0 1.0
    %760 = vmatprep.subr.mxu0 0.0
    %761 = vmatpush1.msra.mxu0 1.0
    %762 = vmatprep.subr.mxu0 0.0
    %763 = vmatpush1.msra.mxu0 1.0
    %764 = vmatprep.subr.mxu0 0.0
    %765 = vmatpush1.msra.mxu0 1.0
    %766 = vmatprep.subr.mxu0 0.0
    %767 = vmatpush1.msra.mxu0 1.0
    %768 = vmatprep.subr.mxu0 0.0
    %769 = vmatpush1.msra.mxu0 1.0
    %770 = vmatprep.subr.mxu0 0.0
    %771 = vmatpush2.msra.mxu0 0.0
    %772 = vmatprep.subr.mxu0 0.0
    %773 = vmatpush2.msra.mxu0 0.0
    %774 = vmatprep.subr.mxu0 0.0
    %775 = vmatpush2.msra.mxu0 0.0
    %776 = vmatprep.subr.mxu0 0.0
    %777 = vmatpush2.msra.mxu0 0.0
    %778 = vmatprep.subr.mxu0 0.0
    %779 = vmatpush2.msra.mxu0 0.0
    %780 = vmatprep.subr.mxu0 0.0
    %781 = vmatpush2.msra.mxu0 0.0
    %782 = vmatprep.subr.mxu0 0.0
    %783 = vmatpush2.msra.mxu0 0.0
    %784 = vmatprep.subr.mxu0 0.0
    %785 = vmatpush2.msra.mxu0 0.0
    %786 = vmatprep.subr.mxu0 0.0
    %787 = vmatpush2.msra.mxu0 0.0
    %788 = vmatprep.subr.mxu0 0.0
    %789 = vmatpush2.msra.mxu0 0.0
    %790 = vmatprep.subr.mxu0 0.0
    %791 = vmatpush2.msra.mxu0 0.0
    %792 = vmatprep.subr.mxu0 0.0
    %793 = vmatpush2.msra.mxu0 0.0
    %794 = vmatprep.subr.mxu0 0.0
    %795 = vmatpush2.msra.mxu0 0.0
    %796 = vmatprep.subr.mxu0 0.0
    %797 = vmatpush2.msra.mxu0 0.0
    %798 = vmatprep.subr.mxu0 0.0
    %799 = vmatpush2.msra.mxu0 0.0
    %800 = vmatprep.subr.mxu0 0.0
    %801 = vmatpush2.msra.mxu0 0.0
    %802 = vmatprep.mubr.f32.mxu0 0.0
    %803 = vmatmul.mubr.f32.gmra.mxu0 %v734
    %v804 = vpop.f32.mrf.mxu0
    %v805 = vadd.f32 0.0, %v804
    %v806 = vpop.f32.mrf.mxu0
    %807 = vmatprep.mubr.f32.mxu0 0.0
    %808 = vmatmul.mubr.f32.gmra.mxu0 %v735
    %v809 = vpop.f32.mrf.mxu0
    %v810 = vadd.f32 0.0, %v809
    %v811 = vpop.f32.mrf.mxu0
    %812 = vmatprep.mubr.f32.mxu0 0.0
    %813 = vmatmul.mubr.f32.gmra.mxu0 %v736
    %v814 = vpop.f32.mrf.mxu0
    %v815 = vadd.f32 0.0, %v814
    %v816 = vpop.f32.mrf.mxu0
    %817 = vmatprep.mubr.f32.mxu0 0.0
    %818 = vmatmul.mubr.f32.gmra.mxu0 %v737
    %v819 = vpop.f32.mrf.mxu0
    %v820 = vadd.f32 0.0, %v819
    %v821 = vpop.f32.mrf.mxu0
    %822 = vdwg.mxu0
    %v823 = vmul.f32 %v805, 0.0078125
    %v824 = vmul.f32 %v810, 0.0078125
    %v825 = vmul.f32 %v815, 0.0078125
    %v826 = vmul.f32 %v820, 0.0078125
    %v827 = vadd.f32 %v823, 1e-05
    %v828 = vadd.f32 %v824, 1e-05
    %v829 = vadd.f32 %v825, 1e-05
    %v830 = vadd.f32 %v826, 1e-05
    %v831 = vrsqrt.pop %v827
    %v832 = vrsqrt.pop %v828
    %v833 = vrsqrt.pop %v829
    %v834 = vrsqrt.pop %v830
    %836 = vset.pattern.permute.xlu0 0
    %837 = vperm.xlu0 %836, %v831
    %v838 = vpop.permute.xlu0 %837
    %841 = vset.pattern.permute.xlu0 0
    %842 = vperm.xlu0 %841, %v832
    %v843 = vpop.permute.xlu0 %842
    %846 = vset.pattern.permute.xlu0 0
    %847 = vperm.xlu0 %846, %v833
    %v848 = vpop.permute.xlu0 %847
    %851 = vset.pattern.permute.xlu0 0
    %852 = vperm.xlu0 %851, %v834
    %v853 = vpop.permute.xlu0 %852
    %v855 = vmul.f32 %v730, %v838
    %v856 = vmul.f32 %v731, %v843
    %v857 = vmul.f32 %v732, %v848
    %v858 = vmul.f32 %v733, %v853
    %v859 = vmax.f32 %v855, 0.0
    %v860 = vmax.f32 %v856, 0.0
    %v861 = vmax.f32 %v857, 0.0
    %v862 = vmax.f32 %v858, 0.0
    %v863 = vpack.c.bf16 %v860, %v859
    %v864 = vpack.c.bf16 %v862, %v861
    %865 = vmatprep.subr.bf16.mxu0 0
    %866 = vmatpush1.bf16.msra.mxu0 %v291
    %867 = vmatprep.subr.bf16.mxu0 0
    %868 = vmatpush1.bf16.msra.mxu0 %v290
    %869 = vmatprep.subr.bf16.mxu0 0
    %870 = vmatpush1.bf16.msra.mxu0 %v289
    %871 = vmatprep.subr.bf16.mxu0 0
    %872 = vmatpush1.bf16.msra.mxu0 %v288
    %873 = vmatprep.subr.bf16.mxu0 0
    %874 = vmatpush1.bf16.msra.mxu0 %v287
    %875 = vmatprep.subr.bf16.mxu0 0
    %876 = vmatpush1.bf16.msra.mxu0 %v286
    %877 = vmatprep.subr.bf16.mxu0 0
    %878 = vmatpush1.bf16.msra.mxu0 %v285
    %879 = vmatprep.subr.bf16.mxu0 0
    %880 = vmatpush1.bf16.msra.mxu0 %v284
    %881 = vmatprep.subr.bf16.mxu0 0
    %882 = vmatpush2.bf16.msra.mxu0 0
    %883 = vmatprep.subr.bf16.mxu0 0
    %884 = vmatpush2.bf16.msra.mxu0 0
    %885 = vmatprep.subr.bf16.mxu0 0
    %886 = vmatpush2.bf16.msra.mxu0 0
    %887 = vmatprep.subr.bf16.mxu0 0
    %888 = vmatpush2.bf16.msra.mxu0 0
    %889 = vmatprep.subr.bf16.mxu0 0
    %890 = vmatpush2.bf16.msra.mxu0 0
    %891 = vmatprep.subr.bf16.mxu0 0
    %892 = vmatpush2.bf16.msra.mxu0 0
    %893 = vmatprep.subr.bf16.mxu0 0
    %894 = vmatpush2.bf16.msra.mxu0 0
    %895 = vmatprep.subr.bf16.mxu0 0
    %896 = vmatpush2.bf16.msra.mxu0 0
    %897 = vmatprep.mubr.bf16.mxu0 0
    %898 = vmatmul.mubr.bf16.gmra.mxu0 %v863
    %v899 = vpop.f32.mrf.mxu0
    %v900 = vadd.f32 0.0, %v899
    %v901 = vpop.f32.mrf.mxu0
    %v902 = vpop.f32.mrf.mxu0
    %v903 = vadd.f32 0.0, %v902
    %v904 = vpop.f32.mrf.mxu0
    %905 = vmatprep.mubr.bf16.mxu0 0
    %906 = vmatmul.mubr.bf16.gmra.mxu0 %v864
    %v907 = vpop.f32.mrf.mxu0
    %v908 = vadd.f32 0.0, %v907
    %v909 = vpop.f32.mrf.mxu0
    %v910 = vpop.f32.mrf.mxu0
    %v911 = vadd.f32 0.0, %v910
    %v912 = vpop.f32.mrf.mxu0
    %913 = vdwg.mxu0
    %v914 = vld [vmem:[%s8] sm:$0xf]
    %v915 = vld [vmem:[%s8 + $0x4] sm:$0xf]
    %v916 = vld [vmem:[%s8 + $0x8] sm:$0xf]
    %v917 = vld [vmem:[%s8 + $0xc] sm:$0xf]
    %v918 = vld [vmem:[%s8 + $0x10] sm:$0xf]
    %v919 = vld [vmem:[%s8 + $0x14] sm:$0xf]
    %v920 = vld [vmem:[%s8 + $0x18] sm:$0xf]
    %v921 = vld [vmem:[%s8 + $0x1c] sm:$0xf]
    %v922 = vld [vmem:[%s8 + $0x20] sm:$0xf]
    %v923 = vld [vmem:[%s8 + $0x24] sm:$0xf]
    %v924 = vld [vmem:[%s8 + $0x28] sm:$0xf]
    %v925 = vld [vmem:[%s8 + $0x2c] sm:$0xf]
    %v926 = vld [vmem:[%s8 + $0x30] sm:$0xf]
    %v927 = vld [vmem:[%s8 + $0x34] sm:$0xf]
    %v928 = vld [vmem:[%s8 + $0x38] sm:$0xf]
    %v929 = vld [vmem:[%s8 + $0x3c] sm:$0xf]
    %v930 = vpack.c.bf16 %v903, %v900
    %v931 = vpack.c.bf16 %v911, %v908
    %v932 = vld [vmem:[%s5] sm:$0xff]
    %v933 = vld [vmem:[%s5 + $0x8] sm:$0xff]
    %v934 = vld [vmem:[%s5 + $0x10] sm:$0xff]
    %v935 = vld [vmem:[%s5 + $0x18] sm:$0xff]
    %v936 = vld [vmem:[%s5 + $0x20] sm:$0xff]
    %v937 = vld [vmem:[%s5 + $0x28] sm:$0xff]
    %v938 = vld [vmem:[%s5 + $0x30] sm:$0xff]
    %v939 = vld [vmem:[%s5 + $0x38] sm:$0xff]
    %v940 = vld [vmem:[%s5 + $0x40] sm:$0xff]
    %v941 = vld [vmem:[%s5 + $0x48] sm:$0xff]
    %v942 = vld [vmem:[%s5 + $0x50] sm:$0xff]
    %v943 = vld [vmem:[%s5 + $0x58] sm:$0xff]
    %v944 = vld [vmem:[%s5 + $0x60] sm:$0xff]
    %v945 = vld [vmem:[%s5 + $0x68] sm:$0xff]
    %v946 = vld [vmem:[%s5 + $0x70] sm:$0xff]
    %v947 = vld [vmem:[%s5 + $0x78] sm:$0xff]
    %v964 = vunpack.c.l.b16 %v914
    %v965 = vunpack.c.l.b16 %v915
    %v966 = vunpack.c.l.b16 %v916
    %v967 = vunpack.c.l.b16 %v917
    %v968 = vunpack.c.l.b16 %v918
    %v969 = vunpack.c.l.b16 %v919
    %v970 = vunpack.c.l.b16 %v920
    %v971 = vunpack.c.l.b16 %v921
    %v972 = vunpack.c.l.b16 %v922
    %v973 = vunpack.c.l.b16 %v923
    %v974 = vunpack.c.l.b16 %v924
    %v975 = vunpack.c.l.b16 %v925
    %v976 = vunpack.c.l.b16 %v926
    %v977 = vunpack.c.l.b16 %v927
    %v978 = vunpack.c.l.b16 %v928
    %v979 = vunpack.c.l.b16 %v929
    %v980 = vpack.c.b16 %v965, %v964
    %v981 = vpack.c.b16 %v967, %v966
    %v982 = vpack.c.b16 %v969, %v968
    %v983 = vpack.c.b16 %v971, %v970
    %v984 = vpack.c.b16 %v973, %v972
    %v985 = vpack.c.b16 %v975, %v974
    %v986 = vpack.c.b16 %v977, %v976
    %v987 = vpack.c.b16 %v979, %v978
    %vm988 = vcmask 261120
    %v990 = vsel %vm988, %v980, 0
    %v993 = vsel %vm988, %v981, 0
    %v996 = vsel %vm988, %v982, 0
    %v999 = vsel %vm988, %v983, 0
    %v1002 = vsel %vm988, %v984, 0
    %v1005 = vsel %vm988, %v985, 0
    %v1008 = vsel %vm988, %v986, 0
    %v1011 = vsel %vm988, %v987, 0
    %1013 = vmatprep.subr.bf16.mxu0 0
    %1014 = vmatpush1.bf16.msra.mxu0 0
    %1015 = vmatprep.subr.bf16.mxu0 0
    %1016 = vmatpush1.bf16.msra.mxu0 0
    %1017 = vmatprep.subr.bf16.mxu0 0
    %1018 = vmatpush1.bf16.msra.mxu0 0
    %1019 = vmatprep.subr.bf16.mxu0 0
    %1020 = vmatpush1.bf16.msra.mxu0 0
    %1021 = vmatprep.subr.bf16.mxu0 0
    %1022 = vmatpush1.bf16.msra.mxu0 0
    %1023 = vmatprep.subr.bf16.mxu0 0
    %1024 = vmatpush1.bf16.msra.mxu0 0
    %1025 = vmatprep.subr.bf16.mxu0 0
    %1026 = vmatpush1.bf16.msra.mxu0 %v931
    %1027 = vmatprep.subr.bf16.mxu0 0
    %1028 = vmatpush1.bf16.msra.mxu0 %v930
    %1029 = vmatprep.subr.bf16.mxu0 0
    %1030 = vmatpush2.bf16.msra.mxu0 0
    %1031 = vmatprep.subr.bf16.mxu0 0
    %1032 = vmatpush2.bf16.msra.mxu0 0
    %1033 = vmatprep.subr.bf16.mxu0 0
    %1034 = vmatpush2.bf16.msra.mxu0 0
    %1035 = vmatprep.subr.bf16.mxu0 0
    %1036 = vmatpush2.bf16.msra.mxu0 0
    %1037 = vmatprep.subr.bf16.mxu0 0
    %1038 = vmatpush2.bf16.msra.mxu0 0
    %1039 = vmatprep.subr.bf16.mxu0 0
    %1040 = vmatpush2.bf16.msra.mxu0 0
    %1041 = vmatprep.subr.bf16.mxu0 0
    %1042 = vmatpush2.bf16.msra.mxu0 0
    %1043 = vmatprep.subr.bf16.mxu0 0
    %1044 = vmatpush2.bf16.msra.mxu0 0
    %1045 = vmatprep.mubr.bf16.mxu0 0
    %1046 = vmatmul.mubr.bf16.gmra.mxu0 %v990
    %v1047 = vpop.f32.mrf.mxu0
    %v1048 = vadd.f32 %v932, %v1047
    %v1049 = vpop.f32.mrf.mxu0
    %v1050 = vpop.f32.mrf.mxu0
    %v1051 = vadd.f32 %v933, %v1050
    %v1052 = vpop.f32.mrf.mxu0
    %1053 = vmatprep.mubr.bf16.mxu0 0
    %1054 = vmatmul.mubr.bf16.gmra.mxu0 %v993
    %v1055 = vpop.f32.mrf.mxu0
    %v1056 = vadd.f32 %v934, %v1055
    %v1057 = vpop.f32.mrf.mxu0
    %v1058 = vpop.f32.mrf.mxu0
    %v1059 = vadd.f32 %v935, %v1058
    %v1060 = vpop.f32.mrf.mxu0
    %1061 = vmatprep.mubr.bf16.mxu0 0
    %1062 = vmatmul.mubr.bf16.gmra.mxu0 %v996
    %v1063 = vpop.f32.mrf.mxu0
    %v1064 = vadd.f32 %v936, %v1063
    %v1065 = vpop.f32.mrf.mxu0
    %v1066 = vpop.f32.mrf.mxu0
    %v1067 = vadd.f32 %v937, %v1066
    %v1068 = vpop.f32.mrf.mxu0
    %1069 = vmatprep.mubr.bf16.mxu0 0
    %1070 = vmatmul.mubr.bf16.gmra.mxu0 %v999
    %v1071 = vpop.f32.mrf.mxu0
    %v1072 = vadd.f32 %v938, %v1071
    %v1073 = vpop.f32.mrf.mxu0
    %v1074 = vpop.f32.mrf.mxu0
    %v1075 = vadd.f32 %v939, %v1074
    %v1076 = vpop.f32.mrf.mxu0
    %1077 = vmatprep.mubr.bf16.mxu0 0
    %1078 = vmatmul.mubr.bf16.gmra.mxu0 %v1002
    %v1079 = vpop.f32.mrf.mxu0
    %v1080 = vadd.f32 %v940, %v1079
    %v1081 = vpop.f32.mrf.mxu0
    %v1082 = vpop.f32.mrf.mxu0
    %v1083 = vadd.f32 %v941, %v1082
    %v1084 = vpop.f32.mrf.mxu0
    %1085 = vmatprep.mubr.bf16.mxu0 0
    %1086 = vmatmul.mubr.bf16.gmra.mxu0 %v1005
    %v1087 = vpop.f32.mrf.mxu0
    %v1088 = vadd.f32 %v942, %v1087
    %v1089 = vpop.f32.mrf.mxu0
    %v1090 = vpop.f32.mrf.mxu0
    %v1091 = vadd.f32 %v943, %v1090
    %v1092 = vpop.f32.mrf.mxu0
    %1093 = vmatprep.mubr.bf16.mxu0 0
    %1094 = vmatmul.mubr.bf16.gmra.mxu0 %v1008
    %v1095 = vpop.f32.mrf.mxu0
    %v1096 = vadd.f32 %v944, %v1095
    %v1097 = vpop.f32.mrf.mxu0
    %v1098 = vpop.f32.mrf.mxu0
    %v1099 = vadd.f32 %v945, %v1098
    %v1100 = vpop.f32.mrf.mxu0
    %1101 = vmatprep.mubr.bf16.mxu0 0
    %1102 = vmatmul.mubr.bf16.gmra.mxu0 %v1011
    %v1103 = vpop.f32.mrf.mxu0
    %v1104 = vadd.f32 %v946, %v1103
    %v1105 = vpop.f32.mrf.mxu0
    %v1106 = vpop.f32.mrf.mxu0
    %v1107 = vadd.f32 %v947, %v1106
    %v1108 = vpop.f32.mrf.mxu0
    %1109 = vdwg.mxu0
    %v1110 = vmul.f32 %v1048, %v233
    %v1111 = vmul.f32 %v1051, %v234
    %v1112 = vmul.f32 %v1056, %v235
    %v1113 = vmul.f32 %v1059, %v236
    %v1114 = vmul.f32 %v1064, %v237
    %v1115 = vmul.f32 %v1067, %v238
    %v1116 = vmul.f32 %v1072, %v239
    %v1117 = vmul.f32 %v1075, %v240
    %v1118 = vmul.f32 %v1080, %v241
    %v1119 = vmul.f32 %v1083, %v242
    %v1120 = vmul.f32 %v1088, %v243
    %v1121 = vmul.f32 %v1091, %v244
    %v1122 = vmul.f32 %v1096, %v245
    %v1123 = vmul.f32 %v1099, %v246
    %v1124 = vmul.f32 %v1104, %v247
    %v1125 = vmul.f32 %v1107, %v248
    %v1126 = vpack.c.bf16 %v1111, %v1110
    %v1127 = vpack.c.bf16 %v1113, %v1112
    %v1128 = vpack.c.bf16 %v1115, %v1114
    %v1129 = vpack.c.bf16 %v1117, %v1116
    %v1130 = vpack.c.bf16 %v1119, %v1118
    %v1131 = vpack.c.bf16 %v1121, %v1120
    %v1132 = vpack.c.bf16 %v1123, %v1122
    %v1133 = vpack.c.bf16 %v1125, %v1124
    %1134 = vmatprep.subr.bf16.mxu0 0
    %1135 = vmatpush1.bf16.msra.mxu0 %v1133
    %1136 = vmatprep.subr.bf16.mxu0 0
    %1137 = vmatpush1.bf16.msra.mxu0 %v1132
    %1138 = vmatprep.subr.bf16.mxu0 0
    %1139 = vmatpush1.bf16.msra.mxu0 %v1131
    %1140 = vmatprep.subr.bf16.mxu0 0
    %1141 = vmatpush1.bf16.msra.mxu0 %v1130
    %1142 = vmatprep.subr.bf16.mxu0 0
    %1143 = vmatpush1.bf16.msra.mxu0 %v1129
    %1144 = vmatprep.subr.bf16.mxu0 0
    %1145 = vmatpush1.bf16.msra.mxu0 %v1128
    %1146 = vmatprep.subr.bf16.mxu0 0
    %1147 = vmatpush1.bf16.msra.mxu0 %v1127
    %1148 = vmatprep.subr.bf16.mxu0 0
    %1149 = vmatpush1.bf16.msra.mxu0 %v1126
    %1150 = vmatprep.subr.bf16.mxu0 0
    %1151 = vmatpush2.bf16.msra.mxu0 0
    %1152 = vmatprep.subr.bf16.mxu0 0
    %1153 = vmatpush2.bf16.msra.mxu0 0
    %1154 = vmatprep.subr.bf16.mxu0 0
    %1155 = vmatpush2.bf16.msra.mxu0 0
    %1156 = vmatprep.subr.bf16.mxu0 0
    %1157 = vmatpush2.bf16.msra.mxu0 0
    %1158 = vmatprep.subr.bf16.mxu0 0
    %1159 = vmatpush2.bf16.msra.mxu0 0
    %1160 = vmatprep.subr.bf16.mxu0 0
    %1161 = vmatpush2.bf16.msra.mxu0 0
    %1162 = vmatprep.subr.bf16.mxu0 0
    %1163 = vmatpush2.bf16.msra.mxu0 0
    %1164 = vmatprep.subr.bf16.mxu0 0
    %1165 = vmatpush2.bf16.msra.mxu0 0
    %1166 = vmatprep.mubr.bf16.mxu0 0
    %1167 = vmatmul.mubr.bf16.gmra.mxu0 %v568
    %v1168 = vpop.f32.mrf.mxu0
    %v1169 = vadd.f32 0.0, %v1168
    %v1170 = vpop.f32.mrf.mxu0
    %v1171 = vpop.f32.mrf.mxu0
    %v1172 = vadd.f32 0.0, %v1171
    %v1173 = vpop.f32.mrf.mxu0
    %1174 = vmatprep.mubr.bf16.mxu0 0
    %1175 = vmatmul.mubr.bf16.gmra.mxu0 %v569
    %v1176 = vpop.f32.mrf.mxu0
    %v1177 = vadd.f32 0.0, %v1176
    %v1178 = vpop.f32.mrf.mxu0
    %v1179 = vpop.f32.mrf.mxu0
    %v1180 = vadd.f32 0.0, %v1179
    %v1181 = vpop.f32.mrf.mxu0
    %1182 = vdwg.mxu0
    %1183 = vmatprep.subr.mxu0 0.0
    %1184 = vmatpush1.msra.mxu0 1.0
    %1185 = vmatprep.subr.mxu0 0.0
    %1186 = vmatpush1.msra.mxu0 1.0
    %1187 = vmatprep.subr.mxu0 0.0
    %1188 = vmatpush1.msra.mxu0 1.0
    %1189 = vmatprep.subr.mxu0 0.0
    %1190 = vmatpush1.msra.mxu0 1.0
    %1191 = vmatprep.subr.mxu0 0.0
    %1192 = vmatpush1.msra.mxu0 1.0
    %1193 = vmatprep.subr.mxu0 0.0
    %1194 = vmatpush1.msra.mxu0 1.0
    %1195 = vmatprep.subr.mxu0 0.0
    %1196 = vmatpush1.msra.mxu0 1.0
    %1197 = vmatprep.subr.mxu0 0.0
    %1198 = vmatpush1.msra.mxu0 1.0
    %1199 = vmatprep.subr.mxu0 0.0
    %1200 = vmatpush1.msra.mxu0 1.0
    %1201 = vmatprep.subr.mxu0 0.0
    %1202 = vmatpush1.msra.mxu0 1.0
    %1203 = vmatprep.subr.mxu0 0.0
    %1204 = vmatpush1.msra.mxu0 1.0
    %1205 = vmatprep.subr.mxu0 0.0
    %1206 = vmatpush1.msra.mxu0 1.0
    %1207 = vmatprep.subr.mxu0 0.0
    %1208 = vmatpush1.msra.mxu0 1.0
    %1209 = vmatprep.subr.mxu0 0.0
    %1210 = vmatpush1.msra.mxu0 1.0
    %1211 = vmatprep.subr.mxu0 0.0
    %1212 = vmatpush1.msra.mxu0 1.0
    %1213 = vmatprep.subr.mxu0 0.0
    %1214 = vmatpush1.msra.mxu0 1.0
    %1215 = vmatprep.subr.mxu0 0.0
    %1216 = vmatpush2.msra.mxu0 0.0
    %1217 = vmatprep.subr.mxu0 0.0
    %1218 = vmatpush2.msra.mxu0 0.0
    %1219 = vmatprep.subr.mxu0 0.0
    %1220 = vmatpush2.msra.mxu0 0.0
    %1221 = vmatprep.subr.mxu0 0.0
    %1222 = vmatpush2.msra.mxu0 0.0
    %1223 = vmatprep.subr.mxu0 0.0
    %1224 = vmatpush2.msra.mxu0 0.0
    %1225 = vmatprep.subr.mxu0 0.0
    %1226 = vmatpush2.msra.mxu0 0.0
    %1227 = vmatprep.subr.mxu0 0.0
    %1228 = vmatpush2.msra.mxu0 0.0
    %1229 = vmatprep.subr.mxu0 0.0
    %1230 = vmatpush2.msra.mxu0 0.0
    %1231 = vmatprep.subr.mxu0 0.0
    %1232 = vmatpush2.msra.mxu0 0.0
    %1233 = vmatprep.subr.mxu0 0.0
    %1234 = vmatpush2.msra.mxu0 0.0
    %1235 = vmatprep.subr.mxu0 0.0
    %1236 = vmatpush2.msra.mxu0 0.0
    %1237 = vmatprep.subr.mxu0 0.0
    %1238 = vmatpush2.msra.mxu0 0.0
    %1239 = vmatprep.subr.mxu0 0.0
    %1240 = vmatpush2.msra.mxu0 0.0
    %1241 = vmatprep.subr.mxu0 0.0
    %1242 = vmatpush2.msra.mxu0 0.0
    %1243 = vmatprep.subr.mxu0 0.0
    %1244 = vmatpush2.msra.mxu0 0.0
    %1245 = vmatprep.subr.mxu0 0.0
    %1246 = vmatpush2.msra.mxu0 0.0
    %1247 = vmatprep.mubr.f32.mxu0 0.0
    %1248 = vmatmul.mubr.f32.gmra.mxu0 %v1169
    %v1249 = vpop.f32.mrf.mxu0
    %v1250 = vadd.f32 0.0, %v1249
    %v1251 = vpop.f32.mrf.mxu0
    %1252 = vmatprep.mubr.f32.mxu0 0.0
    %1253 = vmatmul.mubr.f32.gmra.mxu0 %v1172
    %v1254 = vpop.f32.mrf.mxu0
    %v1255 = vadd.f32 0.0, %v1254
    %v1256 = vpop.f32.mrf.mxu0
    %1257 = vmatprep.mubr.f32.mxu0 0.0
    %1258 = vmatmul.mubr.f32.gmra.mxu0 %v1177
    %v1259 = vpop.f32.mrf.mxu0
    %v1260 = vadd.f32 0.0, %v1259
    %v1261 = vpop.f32.mrf.mxu0
    %1262 = vmatprep.mubr.f32.mxu0 0.0
    %1263 = vmatmul.mubr.f32.gmra.mxu0 %v1180
    %v1264 = vpop.f32.mrf.mxu0
    %v1265 = vadd.f32 0.0, %v1264
    %v1266 = vpop.f32.mrf.mxu0
    %1267 = vdwg.mxu0
    %v1268 = vmul.f32 %v1250, 0.0078125
    %v1269 = vmul.f32 %v1255, 0.0078125
    %v1270 = vmul.f32 %v1260, 0.0078125
    %v1271 = vmul.f32 %v1265, 0.0078125
    %1273 = vset.pattern.permute.xlu0 0
    %1274 = vperm.xlu0 %1273, %v1268
    %v1275 = vpop.permute.xlu0 %1274
    %1278 = vset.pattern.permute.xlu0 0
    %1279 = vperm.xlu0 %1278, %v1269
    %v1280 = vpop.permute.xlu0 %1279
    %1283 = vset.pattern.permute.xlu0 0
    %1284 = vperm.xlu0 %1283, %v1270
    %v1285 = vpop.permute.xlu0 %1284
    %1288 = vset.pattern.permute.xlu0 0
    %1289 = vperm.xlu0 %1288, %v1271
    %v1290 = vpop.permute.xlu0 %1289
    %v1292 = vsub.f32 %v1169, %v1275
    %v1293 = vsub.f32 %v1172, %v1280
    %v1294 = vsub.f32 %v1177, %v1285
    %v1295 = vsub.f32 %v1180, %v1290
    %v1296 = vmul.f32 %v1292, %v1292
    %v1297 = vmul.f32 %v1293, %v1293
    %v1298 = vmul.f32 %v1294, %v1294
    %v1299 = vmul.f32 %v1295, %v1295
    %1300 = vmatprep.subr.mxu0 0.0
    %1301 = vmatpush1.msra.mxu0 1.0
    %1302 = vmatprep.subr.mxu0 0.0
    %1303 = vmatpush1.msra.mxu0 1.0
    %1304 = vmatprep.subr.mxu0 0.0
    %1305 = vmatpush1.msra.mxu0 1.0
    %1306 = vmatprep.subr.mxu0 0.0
    %1307 = vmatpush1.msra.mxu0 1.0
    %1308 = vmatprep.subr.mxu0 0.0
    %1309 = vmatpush1.msra.mxu0 1.0
    %1310 = vmatprep.subr.mxu0 0.0
    %1311 = vmatpush1.msra.mxu0 1.0
    %1312 = vmatprep.subr.mxu0 0.0
    %1313 = vmatpush1.msra.mxu0 1.0
    %1314 = vmatprep.subr.mxu0 0.0
    %1315 = vmatpush1.msra.mxu0 1.0
    %1316 = vmatprep.subr.mxu0 0.0
    %1317 = vmatpush1.msra.mxu0 1.0
    %1318 = vmatprep.subr.mxu0 0.0
    %1319 = vmatpush1.msra.mxu0 1.0
    %1320 = vmatprep.subr.mxu0 0.0
    %1321 = vmatpush1.msra.mxu0 1.0
    %1322 = vmatprep.subr.mxu0 0.0
    %1323 = vmatpush1.msra.mxu0 1.0
    %1324 = vmatprep.subr.mxu0 0.0
    %1325 = vmatpush1.msra.mxu0 1.0
    %1326 = vmatprep.subr.mxu0 0.0
    %1327 = vmatpush1.msra.mxu0 1.0
    %1328 = vmatprep.subr.mxu0 0.0
    %1329 = vmatpush1.msra.mxu0 1.0
    %1330 = vmatprep.subr.mxu0 0.0
    %1331 = vmatpush1.msra.mxu0 1.0
    %1332 = vmatprep.subr.mxu0 0.0
    %1333 = vmatpush2.msra.mxu0 0.0
    %1334 = vmatprep.subr.mxu0 0.0
    %1335 = vmatpush2.msra.mxu0 0.0
    %1336 = vmatprep.subr.mxu0 0.0
    %1337 = vmatpush2.msra.mxu0 0.0
    %1338 = vmatprep.subr.mxu0 0.0
    %1339 = vmatpush2.msra.mxu0 0.0
    %1340 = vmatprep.subr.mxu0 0.0
    %1341 = vmatpush2.msra.mxu0 0.0
    %1342 = vmatprep.subr.mxu0 0.0
    %1343 = vmatpush2.msra.mxu0 0.0
    %1344 = vmatprep.subr.mxu0 0.0
    %1345 = vmatpush2.msra.mxu0 0.0
    %1346 = vmatprep.subr.mxu0 0.0
    %1347 = vmatpush2.msra.mxu0 0.0
    %1348 = vmatprep.subr.mxu0 0.0
    %1349 = vmatpush2.msra.mxu0 0.0
    %1350 = vmatprep.subr.mxu0 0.0
    %1351 = vmatpush2.msra.mxu0 0.0
    %1352 = vmatprep.subr.mxu0 0.0
    %1353 = vmatpush2.msra.mxu0 0.0
    %1354 = vmatprep.subr.mxu0 0.0
    %1355 = vmatpush2.msra.mxu0 0.0
    %1356 = vmatprep.subr.mxu0 0.0
    %1357 = vmatpush2.msra.mxu0 0.0
    %1358 = vmatprep.subr.mxu0 0.0
    %1359 = vmatpush2.msra.mxu0 0.0
    %1360 = vmatprep.subr.mxu0 0.0
    %1361 = vmatpush2.msra.mxu0 0.0
    %1362 = vmatprep.subr.mxu0 0.0
    %1363 = vmatpush2.msra.mxu0 0.0
    %1364 = vmatprep.mubr.f32.mxu0 0.0
    %1365 = vmatmul.mubr.f32.gmra.mxu0 %v1296
    %v1366 = vpop.f32.mrf.mxu0
    %v1367 = vadd.f32 0.0, %v1366
    %v1368 = vpop.f32.mrf.mxu0
    %1369 = vmatprep.mubr.f32.mxu0 0.0
    %1370 = vmatmul.mubr.f32.gmra.mxu0 %v1297
    %v1371 = vpop.f32.mrf.mxu0
    %v1372 = vadd.f32 0.0, %v1371
    %v1373 = vpop.f32.mrf.mxu0
    %1374 = vmatprep.mubr.f32.mxu0 0.0
    %1375 = vmatmul.mubr.f32.gmra.mxu0 %v1298
    %v1376 = vpop.f32.mrf.mxu0
    %v1377 = vadd.f32 0.0, %v1376
    %v1378 = vpop.f32.mrf.mxu0
    %1379 = vmatprep.mubr.f32.mxu0 0.0
    %1380 = vmatmul.mubr.f32.gmra.mxu0 %v1299
    %v1381 = vpop.f32.mrf.mxu0
    %v1382 = vadd.f32 0.0, %v1381
    %v1383 = vpop.f32.mrf.mxu0
    %1384 = vdwg.mxu0
    %v1385 = vmul.f32 %v1367, 0.0078125
    %v1386 = vmul.f32 %v1372, 0.0078125
    %v1387 = vmul.f32 %v1377, 0.0078125
    %v1388 = vmul.f32 %v1382, 0.0078125
    %v1389 = vadd.f32 %v1385, 1e-05
    %v1390 = vadd.f32 %v1386, 1e-05
    %v1391 = vadd.f32 %v1387, 1e-05
    %v1392 = vadd.f32 %v1388, 1e-05
    %v1393 = vrsqrt.pop %v1389
    %v1394 = vrsqrt.pop %v1390
    %v1395 = vrsqrt.pop %v1391
    %v1396 = vrsqrt.pop %v1392
    %1398 = vset.pattern.permute.xlu0 0
    %1399 = vperm.xlu0 %1398, %v1393
    %v1400 = vpop.permute.xlu0 %1399
    %1403 = vset.pattern.permute.xlu0 0
    %1404 = vperm.xlu0 %1403, %v1394
    %v1405 = vpop.permute.xlu0 %1404
    %1408 = vset.pattern.permute.xlu0 0
    %1409 = vperm.xlu0 %1408, %v1395
    %v1410 = vpop.permute.xlu0 %1409
    %1413 = vset.pattern.permute.xlu0 0
    %1414 = vperm.xlu0 %1413, %v1396
    %v1415 = vpop.permute.xlu0 %1414
    %v1417 = vmul.f32 %v1292, %v1400
    %v1418 = vmul.f32 %v1293, %v1405
    %v1419 = vmul.f32 %v1294, %v1410
    %v1420 = vmul.f32 %v1295, %v1415
    %v1421 = vmax.f32 %v1417, 0.0
    %v1422 = vmax.f32 %v1418, 0.0
    %v1423 = vmax.f32 %v1419, 0.0
    %v1424 = vmax.f32 %v1420, 0.0
    %v1425 = vpack.c.bf16 %v1422, %v1421
    %v1426 = vpack.c.bf16 %v1424, %v1423
    %1427 = vmatprep.subr.bf16.mxu0 0
    %1428 = vmatpush1.bf16.msra.mxu0 %v291
    %1429 = vmatprep.subr.bf16.mxu0 0
    %1430 = vmatpush1.bf16.msra.mxu0 %v290
    %1431 = vmatprep.subr.bf16.mxu0 0
    %1432 = vmatpush1.bf16.msra.mxu0 %v289
    %1433 = vmatprep.subr.bf16.mxu0 0
    %1434 = vmatpush1.bf16.msra.mxu0 %v288
    %1435 = vmatprep.subr.bf16.mxu0 0
    %1436 = vmatpush1.bf16.msra.mxu0 %v287
    %1437 = vmatprep.subr.bf16.mxu0 0
    %1438 = vmatpush1.bf16.msra.mxu0 %v286
    %1439 = vmatprep.subr.bf16.mxu0 0
    %1440 = vmatpush1.bf16.msra.mxu0 %v285
    %1441 = vmatprep.subr.bf16.mxu0 0
    %1442 = vmatpush1.bf16.msra.mxu0 %v284
    %1443 = vmatprep.subr.bf16.mxu0 0
    %1444 = vmatpush2.bf16.msra.mxu0 0
    %1445 = vmatprep.subr.bf16.mxu0 0
    %1446 = vmatpush2.bf16.msra.mxu0 0
    %1447 = vmatprep.subr.bf16.mxu0 0
    %1448 = vmatpush2.bf16.msra.mxu0 0
    %1449 = vmatprep.subr.bf16.mxu0 0
    %1450 = vmatpush2.bf16.msra.mxu0 0
    %1451 = vmatprep.subr.bf16.mxu0 0
    %1452 = vmatpush2.bf16.msra.mxu0 0
    %1453 = vmatprep.subr.bf16.mxu0 0
    %1454 = vmatpush2.bf16.msra.mxu0 0
    %1455 = vmatprep.subr.bf16.mxu0 0
    %1456 = vmatpush2.bf16.msra.mxu0 0
    %1457 = vmatprep.subr.bf16.mxu0 0
    %1458 = vmatpush2.bf16.msra.mxu0 0
    %1459 = vmatprep.mubr.bf16.mxu0 0
    %1460 = vmatmul.mubr.bf16.gmra.mxu0 %v1425
    %v1461 = vpop.f32.mrf.mxu0
    %v1462 = vadd.f32 0.0, %v1461
    %v1463 = vpop.f32.mrf.mxu0
    %v1464 = vpop.f32.mrf.mxu0
    %v1465 = vadd.f32 0.0, %v1464
    %v1466 = vpop.f32.mrf.mxu0
    %1467 = vmatprep.mubr.bf16.mxu0 0
    %1468 = vmatmul.mubr.bf16.gmra.mxu0 %v1426
    %v1469 = vpop.f32.mrf.mxu0
    %v1470 = vadd.f32 0.0, %v1469
    %v1471 = vpop.f32.mrf.mxu0
    %v1472 = vpop.f32.mrf.mxu0
    %v1473 = vadd.f32 0.0, %v1472
    %v1474 = vpop.f32.mrf.mxu0
    %1475 = vdwg.mxu0
    %v1476 = vld [vmem:[%s9] sm:$0xf]
    %v1477 = vld [vmem:[%s9 + $0x4] sm:$0xf]
    %v1478 = vld [vmem:[%s9 + $0x8] sm:$0xf]
    %v1479 = vld [vmem:[%s9 + $0xc] sm:$0xf]
    %v1480 = vld [vmem:[%s9 + $0x10] sm:$0xf]
    %v1481 = vld [vmem:[%s9 + $0x14] sm:$0xf]
    %v1482 = vld [vmem:[%s9 + $0x18] sm:$0xf]
    %v1483 = vld [vmem:[%s9 + $0x1c] sm:$0xf]
    %v1484 = vld [vmem:[%s9 + $0x20] sm:$0xf]
    %v1485 = vld [vmem:[%s9 + $0x24] sm:$0xf]
    %v1486 = vld [vmem:[%s9 + $0x28] sm:$0xf]
    %v1487 = vld [vmem:[%s9 + $0x2c] sm:$0xf]
    %v1488 = vld [vmem:[%s9 + $0x30] sm:$0xf]
    %v1489 = vld [vmem:[%s9 + $0x34] sm:$0xf]
    %v1490 = vld [vmem:[%s9 + $0x38] sm:$0xf]
    %v1491 = vld [vmem:[%s9 + $0x3c] sm:$0xf]
    %v1492 = vpack.c.bf16 %v1465, %v1462
    %v1493 = vpack.c.bf16 %v1473, %v1470
    %v1494 = vld [vmem:[#allocation7] sm:$0xff]
    %v1495 = vld [vmem:[#allocation7 + $0x8] sm:$0xff]
    %v1496 = vld [vmem:[#allocation7 + $0x10] sm:$0xff]
    %v1497 = vld [vmem:[#allocation7 + $0x18] sm:$0xff]
    %v1498 = vld [vmem:[#allocation7 + $0x20] sm:$0xff]
    %v1499 = vld [vmem:[#allocation7 + $0x28] sm:$0xff]
    %v1500 = vld [vmem:[#allocation7 + $0x30] sm:$0xff]
    %v1501 = vld [vmem:[#allocation7 + $0x38] sm:$0xff]
    %v1502 = vld [vmem:[#allocation7 + $0x40] sm:$0xff]
    %v1503 = vld [vmem:[#allocation7 + $0x48] sm:$0xff]
    %v1504 = vld [vmem:[#allocation7 + $0x50] sm:$0xff]
    %v1505 = vld [vmem:[#allocation7 + $0x58] sm:$0xff]
    %v1506 = vld [vmem:[#allocation7 + $0x60] sm:$0xff]
    %v1507 = vld [vmem:[#allocation7 + $0x68] sm:$0xff]
    %v1508 = vld [vmem:[#allocation7 + $0x70] sm:$0xff]
    %v1509 = vld [vmem:[#allocation7 + $0x78] sm:$0xff]
    %v1526 = vunpack.c.l.b16 %v1476
    %v1527 = vunpack.c.l.b16 %v1477
    %v1528 = vunpack.c.l.b16 %v1478
    %v1529 = vunpack.c.l.b16 %v1479
    %v1530 = vunpack.c.l.b16 %v1480
    %v1531 = vunpack.c.l.b16 %v1481
    %v1532 = vunpack.c.l.b16 %v1482
    %v1533 = vunpack.c.l.b16 %v1483
    %v1534 = vunpack.c.l.b16 %v1484
    %v1535 = vunpack.c.l.b16 %v1485
    %v1536 = vunpack.c.l.b16 %v1486
    %v1537 = vunpack.c.l.b16 %v1487
    %v1538 = vunpack.c.l.b16 %v1488
    %v1539 = vunpack.c.l.b16 %v1489
    %v1540 = vunpack.c.l.b16 %v1490
    %v1541 = vunpack.c.l.b16 %v1491
    %v1542 = vpack.c.b16 %v1527, %v1526
    %v1543 = vpack.c.b16 %v1529, %v1528
    %v1544 = vpack.c.b16 %v1531, %v1530
    %v1545 = vpack.c.b16 %v1533, %v1532
    %v1546 = vpack.c.b16 %v1535, %v1534
    %v1547 = vpack.c.b16 %v1537, %v1536
    %v1548 = vpack.c.b16 %v1539, %v1538
    %v1549 = vpack.c.b16 %v1541, %v1540
    %v1551 = vsel %vm988, %v1542, 0
    %v1554 = vsel %vm988, %v1543, 0
    %v1557 = vsel %vm988, %v1544, 0
    %v1560 = vsel %vm988, %v1545, 0
    %v1563 = vsel %vm988, %v1546, 0
    %v1566 = vsel %vm988, %v1547, 0
    %v1569 = vsel %vm988, %v1548, 0
    %v1572 = vsel %vm988, %v1549, 0
    %1574 = vmatprep.subr.bf16.mxu0 0
    %1575 = vmatpush1.bf16.msra.mxu0 0
    %1576 = vmatprep.subr.bf16.mxu0 0
    %1577 = vmatpush1.bf16.msra.mxu0 0
    %1578 = vmatprep.subr.bf16.mxu0 0
    %1579 = vmatpush1.bf16.msra.mxu0 0
    %1580 = vmatprep.subr.bf16.mxu0 0
    %1581 = vmatpush1.bf16.msra.mxu0 0
    %1582 = vmatprep.subr.bf16.mxu0 0
    %1583 = vmatpush1.bf16.msra.mxu0 0
    %1584 = vmatprep.subr.bf16.mxu0 0
    %1585 = vmatpush1.bf16.msra.mxu0 0
    %1586 = vmatprep.subr.bf16.mxu0 0
    %1587 = vmatpush1.bf16.msra.mxu0 %v1493
    %1588 = vmatprep.subr.bf16.mxu0 0
    %1589 = vmatpush1.bf16.msra.mxu0 %v1492
    %1590 = vmatprep.subr.bf16.mxu0 0
    %1591 = vmatpush2.bf16.msra.mxu0 0
    %1592 = vmatprep.subr.bf16.mxu0 0
    %1593 = vmatpush2.bf16.msra.mxu0 0
    %1594 = vmatprep.subr.bf16.mxu0 0
    %1595 = vmatpush2.bf16.msra.mxu0 0
    %1596 = vmatprep.subr.bf16.mxu0 0
    %1597 = vmatpush2.bf16.msra.mxu0 0
    %1598 = vmatprep.subr.bf16.mxu0 0
    %1599 = vmatpush2.bf16.msra.mxu0 0
    %1600 = vmatprep.subr.bf16.mxu0 0
    %1601 = vmatpush2.bf16.msra.mxu0 0
    %1602 = vmatprep.subr.bf16.mxu0 0
    %1603 = vmatpush2.bf16.msra.mxu0 0
    %1604 = vmatprep.subr.bf16.mxu0 0
    %1605 = vmatpush2.bf16.msra.mxu0 0
    %1606 = vmatprep.mubr.bf16.mxu0 0
    %1607 = vmatmul.mubr.bf16.gmra.mxu0 %v1551
    %v1608 = vpop.f32.mrf.mxu0
    %v1609 = vadd.f32 %v1494, %v1608
    %v1610 = vpop.f32.mrf.mxu0
    %v1611 = vpop.f32.mrf.mxu0
    %v1612 = vadd.f32 %v1495, %v1611
    %v1613 = vpop.f32.mrf.mxu0
    %1614 = vmatprep.mubr.bf16.mxu0 0
    %1615 = vmatmul.mubr.bf16.gmra.mxu0 %v1554
    %v1616 = vpop.f32.mrf.mxu0
    %v1617 = vadd.f32 %v1496, %v1616
    %v1618 = vpop.f32.mrf.mxu0
    %v1619 = vpop.f32.mrf.mxu0
    %v1620 = vadd.f32 %v1497, %v1619
    %v1621 = vpop.f32.mrf.mxu0
    %1622 = vmatprep.mubr.bf16.mxu0 0
    %1623 = vmatmul.mubr.bf16.gmra.mxu0 %v1557
    %v1624 = vpop.f32.mrf.mxu0
    %v1625 = vadd.f32 %v1498, %v1624
    %v1626 = vpop.f32.mrf.mxu0
    %v1627 = vpop.f32.mrf.mxu0
    %v1628 = vadd.f32 %v1499, %v1627
    %v1629 = vpop.f32.mrf.mxu0
    %1630 = vmatprep.mubr.bf16.mxu0 0
    %1631 = vmatmul.mubr.bf16.gmra.mxu0 %v1560
    %v1632 = vpop.f32.mrf.mxu0
    %v1633 = vadd.f32 %v1500, %v1632
    %v1634 = vpop.f32.mrf.mxu0
    %v1635 = vpop.f32.mrf.mxu0
    %v1636 = vadd.f32 %v1501, %v1635
    %v1637 = vpop.f32.mrf.mxu0
    %1638 = vmatprep.mubr.bf16.mxu0 0
    %1639 = vmatmul.mubr.bf16.gmra.mxu0 %v1563
    %v1640 = vpop.f32.mrf.mxu0
    %v1641 = vadd.f32 %v1502, %v1640
    %v1642 = vpop.f32.mrf.mxu0
    %v1643 = vpop.f32.mrf.mxu0
    %v1644 = vadd.f32 %v1503, %v1643
    %v1645 = vpop.f32.mrf.mxu0
    %1646 = vmatprep.mubr.bf16.mxu0 0
    %1647 = vmatmul.mubr.bf16.gmra.mxu0 %v1566
    %v1648 = vpop.f32.mrf.mxu0
    %v1649 = vadd.f32 %v1504, %v1648
    %v1650 = vpop.f32.mrf.mxu0
    %v1651 = vpop.f32.mrf.mxu0
    %v1652 = vadd.f32 %v1505, %v1651
    %v1653 = vpop.f32.mrf.mxu0
    %1654 = vmatprep.mubr.bf16.mxu0 0
    %1655 = vmatmul.mubr.bf16.gmra.mxu0 %v1569
    %v1656 = vpop.f32.mrf.mxu0
    %v1657 = vadd.f32 %v1506, %v1656
    %v1658 = vpop.f32.mrf.mxu0
    %v1659 = vpop.f32.mrf.mxu0
    %v1660 = vadd.f32 %v1507, %v1659
    %v1661 = vpop.f32.mrf.mxu0
    %1662 = vmatprep.mubr.bf16.mxu0 0
    %1663 = vmatmul.mubr.bf16.gmra.mxu0 %v1572
    %v1664 = vpop.f32.mrf.mxu0
    %v1665 = vadd.f32 %v1508, %v1664
    %v1666 = vpop.f32.mrf.mxu0
    %v1667 = vpop.f32.mrf.mxu0
    %v1668 = vadd.f32 %v1509, %v1667
    %v1669 = vpop.f32.mrf.mxu0
    %1670 = vdwg.mxu0
    %v1671 = vmul.f32 %v1609, %v233
    %v1672 = vmul.f32 %v1612, %v234
    %v1673 = vmul.f32 %v1617, %v235
    %v1674 = vmul.f32 %v1620, %v236
    %v1675 = vmul.f32 %v1625, %v237
    %v1676 = vmul.f32 %v1628, %v238
    %v1677 = vmul.f32 %v1633, %v239
    %v1678 = vmul.f32 %v1636, %v240
    %v1679 = vmul.f32 %v1641, %v241
    %v1680 = vmul.f32 %v1644, %v242
    %v1681 = vmul.f32 %v1649, %v243
    %v1682 = vmul.f32 %v1652, %v244
    %v1683 = vmul.f32 %v1657, %v245
    %v1684 = vmul.f32 %v1660, %v246
    %v1685 = vmul.f32 %v1665, %v247
    %v1686 = vmul.f32 %v1668, %v248
    %v1687 = vpack.c.bf16 %v1672, %v1671
    %v1688 = vpack.c.bf16 %v1674, %v1673
    %v1689 = vpack.c.bf16 %v1676, %v1675
    %v1690 = vpack.c.bf16 %v1678, %v1677
    %v1691 = vpack.c.bf16 %v1680, %v1679
    %v1692 = vpack.c.bf16 %v1682, %v1681
    %v1693 = vpack.c.bf16 %v1684, %v1683
    %v1694 = vpack.c.bf16 %v1686, %v1685
    %1695 = vmatprep.subr.bf16.mxu0 0
    %1696 = vmatpush1.bf16.msra.mxu0 %v1694
    %1697 = vmatprep.subr.bf16.mxu0 0
    %1698 = vmatpush1.bf16.msra.mxu0 %v1693
    %1699 = vmatprep.subr.bf16.mxu0 0
    %1700 = vmatpush1.bf16.msra.mxu0 %v1692
    %1701 = vmatprep.subr.bf16.mxu0 0
    %1702 = vmatpush1.bf16.msra.mxu0 %v1691
    %1703 = vmatprep.subr.bf16.mxu0 0
    %1704 = vmatpush1.bf16.msra.mxu0 %v1690
    %1705 = vmatprep.subr.bf16.mxu0 0
    %1706 = vmatpush1.bf16.msra.mxu0 %v1689
    %1707 = vmatprep.subr.bf16.mxu0 0
    %1708 = vmatpush1.bf16.msra.mxu0 %v1688
    %1709 = vmatprep.subr.bf16.mxu0 0
    %1710 = vmatpush1.bf16.msra.mxu0 %v1687
    %1711 = vmatprep.subr.bf16.mxu0 0
    %1712 = vmatpush2.bf16.msra.mxu0 0
    %1713 = vmatprep.subr.bf16.mxu0 0
    %1714 = vmatpush2.bf16.msra.mxu0 0
    %1715 = vmatprep.subr.bf16.mxu0 0
    %1716 = vmatpush2.bf16.msra.mxu0 0
    %1717 = vmatprep.subr.bf16.mxu0 0
    %1718 = vmatpush2.bf16.msra.mxu0 0
    %1719 = vmatprep.subr.bf16.mxu0 0
    %1720 = vmatpush2.bf16.msra.mxu0 0
    %1721 = vmatprep.subr.bf16.mxu0 0
    %1722 = vmatpush2.bf16.msra.mxu0 0
    %1723 = vmatprep.subr.bf16.mxu0 0
    %1724 = vmatpush2.bf16.msra.mxu0 0
    %1725 = vmatprep.subr.bf16.mxu0 0
    %1726 = vmatpush2.bf16.msra.mxu0 0
    %1727 = vmatprep.mubr.bf16.mxu0 0
    %1728 = vmatmul.mubr.bf16.gmra.mxu0 %v568
    %v1729 = vpop.f32.mrf.mxu0
    %v1730 = vadd.f32 0.0, %v1729
    %v1731 = vpop.f32.mrf.mxu0
    %v1732 = vpop.f32.mrf.mxu0
    %v1733 = vadd.f32 0.0, %v1732
    %v1734 = vpop.f32.mrf.mxu0
    %1735 = vmatprep.mubr.bf16.mxu0 0
    %1736 = vmatmul.mubr.bf16.gmra.mxu0 %v569
    %v1737 = vpop.f32.mrf.mxu0
    %v1738 = vadd.f32 0.0, %v1737
    %v1739 = vpop.f32.mrf.mxu0
    %v1740 = vpop.f32.mrf.mxu0
    %v1741 = vadd.f32 0.0, %v1740
    %v1742 = vpop.f32.mrf.mxu0
    %1743 = vdwg.mxu0
    %1744 = vmatprep.subr.mxu0 0.0
    %1745 = vmatpush1.msra.mxu0 1.0
    %1746 = vmatprep.subr.mxu0 0.0
    %1747 = vmatpush1.msra.mxu0 1.0
    %1748 = vmatprep.subr.mxu0 0.0
    %1749 = vmatpush1.msra.mxu0 1.0
    %1750 = vmatprep.subr.mxu0 0.0
    %1751 = vmatpush1.msra.mxu0 1.0
    %1752 = vmatprep.subr.mxu0 0.0
    %1753 = vmatpush1.msra.mxu0 1.0
    %1754 = vmatprep.subr.mxu0 0.0
    %1755 = vmatpush1.msra.mxu0 1.0
    %1756 = vmatprep.subr.mxu0 0.0
    %1757 = vmatpush1.msra.mxu0 1.0
    %1758 = vmatprep.subr.mxu0 0.0
    %1759 = vmatpush1.msra.mxu0 1.0
    %1760 = vmatprep.subr.mxu0 0.0
    %1761 = vmatpush1.msra.mxu0 1.0
    %1762 = vmatprep.subr.mxu0 0.0
    %1763 = vmatpush1.msra.mxu0 1.0
    %1764 = vmatprep.subr.mxu0 0.0
    %1765 = vmatpush1.msra.mxu0 1.0
    %1766 = vmatprep.subr.mxu0 0.0
    %1767 = vmatpush1.msra.mxu0 1.0
    %1768 = vmatprep.subr.mxu0 0.0
    %1769 = vmatpush1.msra.mxu0 1.0
    %1770 = vmatprep.subr.mxu0 0.0
    %1771 = vmatpush1.msra.mxu0 1.0
    %1772 = vmatprep.subr.mxu0 0.0
    %1773 = vmatpush1.msra.mxu0 1.0
    %1774 = vmatprep.subr.mxu0 0.0
    %1775 = vmatpush1.msra.mxu0 1.0
    %1776 = vmatprep.subr.mxu0 0.0
    %1777 = vmatpush2.msra.mxu0 0.0
    %1778 = vmatprep.subr.mxu0 0.0
    %1779 = vmatpush2.msra.mxu0 0.0
    %1780 = vmatprep.subr.mxu0 0.0
    %1781 = vmatpush2.msra.mxu0 0.0
    %1782 = vmatprep.subr.mxu0 0.0
    %1783 = vmatpush2.msra.mxu0 0.0
    %1784 = vmatprep.subr.mxu0 0.0
    %1785 = vmatpush2.msra.mxu0 0.0
    %1786 = vmatprep.subr.mxu0 0.0
    %1787 = vmatpush2.msra.mxu0 0.0
    %1788 = vmatprep.subr.mxu0 0.0
    %1789 = vmatpush2.msra.mxu0 0.0
    %1790 = vmatprep.subr.mxu0 0.0
    %1791 = vmatpush2.msra.mxu0 0.0
    %1792 = vmatprep.subr.mxu0 0.0
    %1793 = vmatpush2.msra.mxu0 0.0
    %1794 = vmatprep.subr.mxu0 0.0
    %1795 = vmatpush2.msra.mxu0 0.0
    %1796 = vmatprep.subr.mxu0 0.0
    %1797 = vmatpush2.msra.mxu0 0.0
    %1798 = vmatprep.subr.mxu0 0.0
    %1799 = vmatpush2.msra.mxu0 0.0
    %1800 = vmatprep.subr.mxu0 0.0
    %1801 = vmatpush2.msra.mxu0 0.0
    %1802 = vmatprep.subr.mxu0 0.0
    %1803 = vmatpush2.msra.mxu0 0.0
    %1804 = vmatprep.subr.mxu0 0.0
    %1805 = vmatpush2.msra.mxu0 0.0
    %1806 = vmatprep.subr.mxu0 0.0
    %1807 = vmatpush2.msra.mxu0 0.0
    %1808 = vmatprep.mubr.f32.mxu0 0.0
    %1809 = vmatmul.mubr.f32.gmra.mxu0 %v1730
    %v1810 = vpop.f32.mrf.mxu0
    %v1811 = vadd.f32 0.0, %v1810
    %v1812 = vpop.f32.mrf.mxu0
    %1813 = vmatprep.mubr.f32.mxu0 0.0
    %1814 = vmatmul.mubr.f32.gmra.mxu0 %v1733
    %v1815 = vpop.f32.mrf.mxu0
    %v1816 = vadd.f32 0.0, %v1815
    %v1817 = vpop.f32.mrf.mxu0
    %1818 = vmatprep.mubr.f32.mxu0 0.0
    %1819 = vmatmul.mubr.f32.gmra.mxu0 %v1738
    %v1820 = vpop.f32.mrf.mxu0
    %v1821 = vadd.f32 0.0, %v1820
    %v1822 = vpop.f32.mrf.mxu0
    %1823 = vmatprep.mubr.f32.mxu0 0.0
    %1824 = vmatmul.mubr.f32.gmra.mxu0 %v1741
    %v1825 = vpop.f32.mrf.mxu0
    %v1826 = vadd.f32 0.0, %v1825
    %v1827 = vpop.f32.mrf.mxu0
    %1828 = vdwg.mxu0
    %v1829 = vmul.f32 %v1811, 0.0078125
    %v1830 = vmul.f32 %v1816, 0.0078125
    %v1831 = vmul.f32 %v1821, 0.0078125
    %v1832 = vmul.f32 %v1826, 0.0078125
    %1834 = vset.pattern.permute.xlu0 0
    %1835 = vperm.xlu0 %1834, %v1829
    %v1836 = vpop.permute.xlu0 %1835
    %1839 = vset.pattern.permute.xlu0 0
    %1840 = vperm.xlu0 %1839, %v1830
    %v1841 = vpop.permute.xlu0 %1840
    %1844 = vset.pattern.permute.xlu0 0
    %1845 = vperm.xlu0 %1844, %v1831
    %v1846 = vpop.permute.xlu0 %1845
    %1849 = vset.pattern.permute.xlu0 0
    %1850 = vperm.xlu0 %1849, %v1832
    %v1851 = vpop.permute.xlu0 %1850
    %v1853 = vsub.f32 %v1730, %v1836
    %v1854 = vsub.f32 %v1733, %v1841
    %v1855 = vsub.f32 %v1738, %v1846
    %v1856 = vsub.f32 %v1741, %v1851
    %v1857 = vmul.f32 %v1853, %v1853
    %v1858 = vmul.f32 %v1854, %v1854
    %v1859 = vmul.f32 %v1855, %v1855
    %v1860 = vmul.f32 %v1856, %v1856
    %1861 = vmatprep.subr.mxu0 0.0
    %1862 = vmatpush1.msra.mxu0 1.0
    %1863 = vmatprep.subr.mxu0 0.0
    %1864 = vmatpush1.msra.mxu0 1.0
    %1865 = vmatprep.subr.mxu0 0.0
    %1866 = vmatpush1.msra.mxu0 1.0
    %1867 = vmatprep.subr.mxu0 0.0
    %1868 = vmatpush1.msra.mxu0 1.0
    %1869 = vmatprep.subr.mxu0 0.0
    %1870 = vmatpush1.msra.mxu0 1.0
    %1871 = vmatprep.subr.mxu0 0.0
    %1872 = vmatpush1.msra.mxu0 1.0
    %1873 = vmatprep.subr.mxu0 0.0
    %1874 = vmatpush1.msra.mxu0 1.0
    %1875 = vmatprep.subr.mxu0 0.0
    %1876 = vmatpush1.msra.mxu0 1.0
    %1877 = vmatprep.subr.mxu0 0.0
    %1878 = vmatpush1.msra.mxu0 1.0
    %1879 = vmatprep.subr.mxu0 0.0
    %1880 = vmatpush1.msra.mxu0 1.0
    %1881 = vmatprep.subr.mxu0 0.0
    %1882 = vmatpush1.msra.mxu0 1.0
    %1883 = vmatprep.subr.mxu0 0.0
    %1884 = vmatpush1.msra.mxu0 1.0
    %1885 = vmatprep.subr.mxu0 0.0
    %1886 = vmatpush1.msra.mxu0 1.0
    %1887 = vmatprep.subr.mxu0 0.0
    %1888 = vmatpush1.msra.mxu0 1.0
    %1889 = vmatprep.subr.mxu0 0.0
    %1890 = vmatpush1.msra.mxu0 1.0
    %1891 = vmatprep.subr.mxu0 0.0
    %1892 = vmatpush1.msra.mxu0 1.0
    %1893 = vmatprep.subr.mxu0 0.0
    %1894 = vmatpush2.msra.mxu0 0.0
    %1895 = vmatprep.subr.mxu0 0.0
    %1896 = vmatpush2.msra.mxu0 0.0
    %1897 = vmatprep.subr.mxu0 0.0
    %1898 = vmatpush2.msra.mxu0 0.0
    %1899 = vmatprep.subr.mxu0 0.0
    %1900 = vmatpush2.msra.mxu0 0.0
    %1901 = vmatprep.subr.mxu0 0.0
    %1902 = vmatpush2.msra.mxu0 0.0
    %1903 = vmatprep.subr.mxu0 0.0
    %1904 = vmatpush2.msra.mxu0 0.0
    %1905 = vmatprep.subr.mxu0 0.0
    %1906 = vmatpush2.msra.mxu0 0.0
    %1907 = vmatprep.subr.mxu0 0.0
    %1908 = vmatpush2.msra.mxu0 0.0
    %1909 = vmatprep.subr.mxu0 0.0
    %1910 = vmatpush2.msra.mxu0 0.0
    %1911 = vmatprep.subr.mxu0 0.0
    %1912 = vmatpush2.msra.mxu0 0.0
    %1913 = vmatprep.subr.mxu0 0.0
    %1914 = vmatpush2.msra.mxu0 0.0
    %1915 = vmatprep.subr.mxu0 0.0
    %1916 = vmatpush2.msra.mxu0 0.0
    %1917 = vmatprep.subr.mxu0 0.0
    %1918 = vmatpush2.msra.mxu0 0.0
    %1919 = vmatprep.subr.mxu0 0.0
    %1920 = vmatpush2.msra.mxu0 0.0
    %1921 = vmatprep.subr.mxu0 0.0
    %1922 = vmatpush2.msra.mxu0 0.0
    %1923 = vmatprep.subr.mxu0 0.0
    %1924 = vmatpush2.msra.mxu0 0.0
    %1925 = vmatprep.mubr.f32.mxu0 0.0
    %1926 = vmatmul.mubr.f32.gmra.mxu0 %v1857
    %v1927 = vpop.f32.mrf.mxu0
    %v1928 = vadd.f32 0.0, %v1927
    %v1929 = vpop.f32.mrf.mxu0
    %1930 = vmatprep.mubr.f32.mxu0 0.0
    %1931 = vmatmul.mubr.f32.gmra.mxu0 %v1858
    %v1932 = vpop.f32.mrf.mxu0
    %v1933 = vadd.f32 0.0, %v1932
    %v1934 = vpop.f32.mrf.mxu0
    %1935 = vmatprep.mubr.f32.mxu0 0.0
    %1936 = vmatmul.mubr.f32.gmra.mxu0 %v1859
    %v1937 = vpop.f32.mrf.mxu0
    %v1938 = vadd.f32 0.0, %v1937
    %v1939 = vpop.f32.mrf.mxu0
    %1940 = vmatprep.mubr.f32.mxu0 0.0
    %1941 = vmatmul.mubr.f32.gmra.mxu0 %v1860
    %v1942 = vpop.f32.mrf.mxu0
    %v1943 = vadd.f32 0.0, %v1942
    %v1944 = vpop.f32.mrf.mxu0
    %1945 = vdwg.mxu0
    %v1946 = vmul.f32 %v1928, 0.0078125
    %v1947 = vmul.f32 %v1933, 0.0078125
    %v1948 = vmul.f32 %v1938, 0.0078125
    %v1949 = vmul.f32 %v1943, 0.0078125
    %v1950 = vadd.f32 %v1946, 1e-05
    %v1951 = vadd.f32 %v1947, 1e-05
    %v1952 = vadd.f32 %v1948, 1e-05
    %v1953 = vadd.f32 %v1949, 1e-05
    %v1954 = vrsqrt.pop %v1950
    %v1955 = vrsqrt.pop %v1951
    %v1956 = vrsqrt.pop %v1952
    %v1957 = vrsqrt.pop %v1953
    %1959 = vset.pattern.permute.xlu0 0
    %1960 = vperm.xlu0 %1959, %v1954
    %v1961 = vpop.permute.xlu0 %1960
    %1964 = vset.pattern.permute.xlu0 0
    %1965 = vperm.xlu0 %1964, %v1955
    %v1966 = vpop.permute.xlu0 %1965
    %1969 = vset.pattern.permute.xlu0 0
    %1970 = vperm.xlu0 %1969, %v1956
    %v1971 = vpop.permute.xlu0 %1970
    %1974 = vset.pattern.permute.xlu0 0
    %1975 = vperm.xlu0 %1974, %v1957
    %v1976 = vpop.permute.xlu0 %1975
    %v1978 = vmul.f32 %v1853, %v1961
    %v1979 = vmul.f32 %v1854, %v1966
    %v1980 = vmul.f32 %v1855, %v1971
    %v1981 = vmul.f32 %v1856, %v1976
    %v1982 = vmax.f32 %v1978, 0.0
    %v1983 = vmax.f32 %v1979, 0.0
    %v1984 = vmax.f32 %v1980, 0.0
    %v1985 = vmax.f32 %v1981, 0.0
    %v1986 = vpack.c.bf16 %v1983, %v1982
    %v1987 = vpack.c.bf16 %v1985, %v1984
    %v1988 = vld [vmem:[#allocation10] sm:$0xf]
    %v1989 = vld [vmem:[#allocation10 + $0x4] sm:$0xf]
    %v1990 = vld [vmem:[#allocation10 + $0x8] sm:$0xf]
    %v1991 = vld [vmem:[#allocation10 + $0xc] sm:$0xf]
    %v1992 = vld [vmem:[#allocation10 + $0x10] sm:$0xf]
    %v1993 = vld [vmem:[#allocation10 + $0x14] sm:$0xf]
    %v1994 = vld [vmem:[#allocation10 + $0x18] sm:$0xf]
    %v1995 = vld [vmem:[#allocation10 + $0x1c] sm:$0xf]
    %v1996 = vld [vmem:[#allocation10 + $0x20] sm:$0xf]
    %v1997 = vld [vmem:[#allocation10 + $0x24] sm:$0xf]
    %v1998 = vld [vmem:[#allocation10 + $0x28] sm:$0xf]
    %v1999 = vld [vmem:[#allocation10 + $0x2c] sm:$0xf]
    %v2000 = vld [vmem:[#allocation10 + $0x30] sm:$0xf]
    %v2001 = vld [vmem:[#allocation10 + $0x34] sm:$0xf]
    %v2002 = vld [vmem:[#allocation10 + $0x38] sm:$0xf]
    %v2003 = vld [vmem:[#allocation10 + $0x3c] sm:$0xf]
    %v2020 = vunpack.c.l.b16 %v1988
    %v2021 = vunpack.c.l.b16 %v1989
    %v2022 = vunpack.c.l.b16 %v1990
    %v2023 = vunpack.c.l.b16 %v1991
    %v2024 = vunpack.c.l.b16 %v1992
    %v2025 = vunpack.c.l.b16 %v1993
    %v2026 = vunpack.c.l.b16 %v1994
    %v2027 = vunpack.c.l.b16 %v1995
    %v2028 = vunpack.c.l.b16 %v1996
    %v2029 = vunpack.c.l.b16 %v1997
    %v2030 = vunpack.c.l.b16 %v1998
    %v2031 = vunpack.c.l.b16 %v1999
    %v2032 = vunpack.c.l.b16 %v2000
    %v2033 = vunpack.c.l.b16 %v2001
    %v2034 = vunpack.c.l.b16 %v2002
    %v2035 = vunpack.c.l.b16 %v2003
    %v2036 = vpack.c.b16 %v2021, %v2020
    %v2037 = vpack.c.b16 %v2023, %v2022
    %v2038 = vpack.c.b16 %v2025, %v2024
    %v2039 = vpack.c.b16 %v2027, %v2026
    %v2040 = vpack.c.b16 %v2029, %v2028
    %v2041 = vpack.c.b16 %v2031, %v2030
    %v2042 = vpack.c.b16 %v2033, %v2032
    %v2043 = vpack.c.b16 %v2035, %v2034
    %2052 = vmatprep.subr.bf16.mxu0 0
    %2053 = vmatpush1.bf16.msra.mxu0 %v2043
    %2054 = vmatprep.subr.bf16.mxu0 0
    %2055 = vmatpush1.bf16.msra.mxu0 %v2042
    %2056 = vmatprep.subr.bf16.mxu0 0
    %2057 = vmatpush1.bf16.msra.mxu0 %v2041
    %2058 = vmatprep.subr.bf16.mxu0 0
    %2059 = vmatpush1.bf16.msra.mxu0 %v2040
    %2060 = vmatprep.subr.bf16.mxu0 0
    %2061 = vmatpush1.bf16.msra.mxu0 %v2039
    %2062 = vmatprep.subr.bf16.mxu0 0
    %2063 = vmatpush1.bf16.msra.mxu0 %v2038
    %2064 = vmatprep.subr.bf16.mxu0 0
    %2065 = vmatpush1.bf16.msra.mxu0 %v2037
    %2066 = vmatprep.subr.bf16.mxu0 0
    %2067 = vmatpush1.bf16.msra.mxu0 %v2036
    %2068 = vmatprep.subr.bf16.mxu0 0
    %2069 = vmatpush2.bf16.msra.mxu0 0
    %2070 = vmatprep.subr.bf16.mxu0 0
    %2071 = vmatpush2.bf16.msra.mxu0 0
    %2072 = vmatprep.subr.bf16.mxu0 0
    %2073 = vmatpush2.bf16.msra.mxu0 0
    %2074 = vmatprep.subr.bf16.mxu0 0
    %2075 = vmatpush2.bf16.msra.mxu0 0
    %2076 = vmatprep.subr.bf16.mxu0 0
    %2077 = vmatpush2.bf16.msra.mxu0 0
    %2078 = vmatprep.subr.bf16.mxu0 0
    %2079 = vmatpush2.bf16.msra.mxu0 0
    %2080 = vmatprep.subr.bf16.mxu0 0
    %2081 = vmatpush2.bf16.msra.mxu0 0
    %2082 = vmatprep.subr.bf16.mxu0 0
    %2083 = vmatpush2.bf16.msra.mxu0 0
    %2084 = vmatprep.mubr.bf16.mxu0 0
    %2085 = vmatmul.mubr.bf16.gmra.mxu0 %v1986
    %v2086 = vpop.f32.mrf.mxu0
    %v2087 = vadd.f32 0.0, %v2086
    %v2088 = vpop.f32.mrf.mxu0
    %v2089 = vpop.f32.mrf.mxu0
    %v2090 = vadd.f32 0.0, %v2089
    %v2091 = vpop.f32.mrf.mxu0
    %2092 = vmatprep.mubr.bf16.mxu0 0
    %2093 = vmatmul.mubr.bf16.gmra.mxu0 %v1987
    %v2094 = vpop.f32.mrf.mxu0
    %v2095 = vadd.f32 0.0, %v2094
    %v2096 = vpop.f32.mrf.mxu0
    %v2097 = vpop.f32.mrf.mxu0
    %v2098 = vadd.f32 0.0, %v2097
    %v2099 = vpop.f32.mrf.mxu0
    %2100 = vdwg.mxu0
    %2101 = vmatprep.subr.mxu0 0.0
    %2102 = vmatpush1.msra.mxu0 1.0
    %2103 = vmatprep.subr.mxu0 0.0
    %2104 = vmatpush1.msra.mxu0 1.0
    %2105 = vmatprep.subr.mxu0 0.0
    %2106 = vmatpush1.msra.mxu0 1.0
    %2107 = vmatprep.subr.mxu0 0.0
    %2108 = vmatpush1.msra.mxu0 1.0
    %2109 = vmatprep.subr.mxu0 0.0
    %2110 = vmatpush1.msra.mxu0 1.0
    %2111 = vmatprep.subr.mxu0 0.0
    %2112 = vmatpush1.msra.mxu0 1.0
    %2113 = vmatprep.subr.mxu0 0.0
    %2114 = vmatpush1.msra.mxu0 1.0
    %2115 = vmatprep.subr.mxu0 0.0
    %2116 = vmatpush1.msra.mxu0 1.0
    %2117 = vmatprep.subr.mxu0 0.0
    %2118 = vmatpush1.msra.mxu0 1.0
    %2119 = vmatprep.subr.mxu0 0.0
    %2120 = vmatpush1.msra.mxu0 1.0
    %2121 = vmatprep.subr.mxu0 0.0
    %2122 = vmatpush1.msra.mxu0 1.0
    %2123 = vmatprep.subr.mxu0 0.0
    %2124 = vmatpush1.msra.mxu0 1.0
    %2125 = vmatprep.subr.mxu0 0.0
    %2126 = vmatpush1.msra.mxu0 1.0
    %2127 = vmatprep.subr.mxu0 0.0
    %2128 = vmatpush1.msra.mxu0 1.0
    %2129 = vmatprep.subr.mxu0 0.0
    %2130 = vmatpush1.msra.mxu0 1.0
    %2131 = vmatprep.subr.mxu0 0.0
    %2132 = vmatpush1.msra.mxu0 1.0
    %2133 = vmatprep.subr.mxu0 0.0
    %2134 = vmatpush2.msra.mxu0 0.0
    %2135 = vmatprep.subr.mxu0 0.0
    %2136 = vmatpush2.msra.mxu0 0.0
    %2137 = vmatprep.subr.mxu0 0.0
    %2138 = vmatpush2.msra.mxu0 0.0
    %2139 = vmatprep.subr.mxu0 0.0
    %2140 = vmatpush2.msra.mxu0 0.0
    %2141 = vmatprep.subr.mxu0 0.0
    %2142 = vmatpush2.msra.mxu0 0.0
    %2143 = vmatprep.subr.mxu0 0.0
    %2144 = vmatpush2.msra.mxu0 0.0
    %2145 = vmatprep.subr.mxu0 0.0
    %2146 = vmatpush2.msra.mxu0 0.0
    %2147 = vmatprep.subr.mxu0 0.0
    %2148 = vmatpush2.msra.mxu0 0.0
    %2149 = vmatprep.subr.mxu0 0.0
    %2150 = vmatpush2.msra.mxu0 0.0
    %2151 = vmatprep.subr.mxu0 0.0
    %2152 = vmatpush2.msra.mxu0 0.0
    %2153 = vmatprep.subr.mxu0 0.0
    %2154 = vmatpush2.msra.mxu0 0.0
    %2155 = vmatprep.subr.mxu0 0.0
    %2156 = vmatpush2.msra.mxu0 0.0
    %2157 = vmatprep.subr.mxu0 0.0
    %2158 = vmatpush2.msra.mxu0 0.0
    %2159 = vmatprep.subr.mxu0 0.0
    %2160 = vmatpush2.msra.mxu0 0.0
    %2161 = vmatprep.subr.mxu0 0.0
    %2162 = vmatpush2.msra.mxu0 0.0
    %2163 = vmatprep.subr.mxu0 0.0
    %2164 = vmatpush2.msra.mxu0 0.0
    %2165 = vmatprep.mubr.f32.mxu0 0.0
    %2166 = vmatmul.mubr.f32.gmra.mxu0 %v2087
    %v2167 = vpop.f32.mrf.mxu0
    %v2168 = vadd.f32 0.0, %v2167
    %v2169 = vpop.f32.mrf.mxu0
    %2170 = vmatprep.mubr.f32.mxu0 0.0
    %2171 = vmatmul.mubr.f32.gmra.mxu0 %v2090
    %v2172 = vpop.f32.mrf.mxu0
    %v2173 = vadd.f32 0.0, %v2172
    %v2174 = vpop.f32.mrf.mxu0
    %2175 = vmatprep.mubr.f32.mxu0 0.0
    %2176 = vmatmul.mubr.f32.gmra.mxu0 %v2095
    %v2177 = vpop.f32.mrf.mxu0
    %v2178 = vadd.f32 0.0, %v2177
    %v2179 = vpop.f32.mrf.mxu0
    %2180 = vmatprep.mubr.f32.mxu0 0.0
    %2181 = vmatmul.mubr.f32.gmra.mxu0 %v2098
    %v2182 = vpop.f32.mrf.mxu0
    %v2183 = vadd.f32 0.0, %v2182
    %v2184 = vpop.f32.mrf.mxu0
    %2185 = vdwg.mxu0
    %v2186 = vmul.f32 %v2168, 0.0078125
    %v2187 = vmul.f32 %v2173, 0.0078125
    %v2188 = vmul.f32 %v2178, 0.0078125
    %v2189 = vmul.f32 %v2183, 0.0078125
    %2191 = vset.pattern.permute.xlu0 0
    %2192 = vperm.xlu0 %2191, %v2186
    %v2193 = vpop.permute.xlu0 %2192
    %2196 = vset.pattern.permute.xlu0 0
    %2197 = vperm.xlu0 %2196, %v2187
    %v2198 = vpop.permute.xlu0 %2197
    %2201 = vset.pattern.permute.xlu0 0
    %2202 = vperm.xlu0 %2201, %v2188
    %v2203 = vpop.permute.xlu0 %2202
    %2206 = vset.pattern.permute.xlu0 0
    %2207 = vperm.xlu0 %2206, %v2189
    %v2208 = vpop.permute.xlu0 %2207
    %v2210 = vsub.f32 %v2087, %v2193
    %v2211 = vsub.f32 %v2090, %v2198
    %v2212 = vsub.f32 %v2095, %v2203
    %v2213 = vsub.f32 %v2098, %v2208
    %v2214 = vmul.f32 %v2210, %v2210
    %v2215 = vmul.f32 %v2211, %v2211
    %v2216 = vmul.f32 %v2212, %v2212
    %v2217 = vmul.f32 %v2213, %v2213
    %2218 = vmatprep.subr.mxu0 0.0
    %2219 = vmatpush1.msra.mxu0 1.0
    %2220 = vmatprep.subr.mxu0 0.0
    %2221 = vmatpush1.msra.mxu0 1.0
    %2222 = vmatprep.subr.mxu0 0.0
    %2223 = vmatpush1.msra.mxu0 1.0
    %2224 = vmatprep.subr.mxu0 0.0
    %2225 = vmatpush1.msra.mxu0 1.0
    %2226 = vmatprep.subr.mxu0 0.0
    %2227 = vmatpush1.msra.mxu0 1.0
    %2228 = vmatprep.subr.mxu0 0.0
    %2229 = vmatpush1.msra.mxu0 1.0
    %2230 = vmatprep.subr.mxu0 0.0
    %2231 = vmatpush1.msra.mxu0 1.0
    %2232 = vmatprep.subr.mxu0 0.0
    %2233 = vmatpush1.msra.mxu0 1.0
    %2234 = vmatprep.subr.mxu0 0.0
    %2235 = vmatpush1.msra.mxu0 1.0
    %2236 = vmatprep.subr.mxu0 0.0
    %2237 = vmatpush1.msra.mxu0 1.0
    %2238 = vmatprep.subr.mxu0 0.0
    %2239 = vmatpush1.msra.mxu0 1.0
    %2240 = vmatprep.subr.mxu0 0.0
    %2241 = vmatpush1.msra.mxu0 1.0
    %2242 = vmatprep.subr.mxu0 0.0
    %2243 = vmatpush1.msra.mxu0 1.0
    %2244 = vmatprep.subr.mxu0 0.0
    %2245 = vmatpush1.msra.mxu0 1.0
    %2246 = vmatprep.subr.mxu0 0.0
    %2247 = vmatpush1.msra.mxu0 1.0
    %2248 = vmatprep.subr.mxu0 0.0
    %2249 = vmatpush1.msra.mxu0 1.0
    %2250 = vmatprep.subr.mxu0 0.0
    %2251 = vmatpush2.msra.mxu0 0.0
    %2252 = vmatprep.subr.mxu0 0.0
    %2253 = vmatpush2.msra.mxu0 0.0
    %2254 = vmatprep.subr.mxu0 0.0
    %2255 = vmatpush2.msra.mxu0 0.0
    %2256 = vmatprep.subr.mxu0 0.0
    %2257 = vmatpush2.msra.mxu0 0.0
    %2258 = vmatprep.subr.mxu0 0.0
    %2259 = vmatpush2.msra.mxu0 0.0
    %2260 = vmatprep.subr.mxu0 0.0
    %2261 = vmatpush2.msra.mxu0 0.0
    %2262 = vmatprep.subr.mxu0 0.0
    %2263 = vmatpush2.msra.mxu0 0.0
    %2264 = vmatprep.subr.mxu0 0.0
    %2265 = vmatpush2.msra.mxu0 0.0
    %2266 = vmatprep.subr.mxu0 0.0
    %2267 = vmatpush2.msra.mxu0 0.0
    %2268 = vmatprep.subr.mxu0 0.0
    %2269 = vmatpush2.msra.mxu0 0.0
    %2270 = vmatprep.subr.mxu0 0.0
    %2271 = vmatpush2.msra.mxu0 0.0
    %2272 = vmatprep.subr.mxu0 0.0
    %2273 = vmatpush2.msra.mxu0 0.0
    %2274 = vmatprep.subr.mxu0 0.0
    %2275 = vmatpush2.msra.mxu0 0.0
    %2276 = vmatprep.subr.mxu0 0.0
    %2277 = vmatpush2.msra.mxu0 0.0
    %2278 = vmatprep.subr.mxu0 0.0
    %2279 = vmatpush2.msra.mxu0 0.0
    %2280 = vmatprep.subr.mxu0 0.0
    %2281 = vmatpush2.msra.mxu0 0.0
    %2282 = vmatprep.mubr.f32.mxu0 0.0
    %2283 = vmatmul.mubr.f32.gmra.mxu0 %v2214
    %v2284 = vpop.f32.mrf.mxu0
    %v2285 = vadd.f32 0.0, %v2284
    %v2286 = vpop.f32.mrf.mxu0
    %2287 = vmatprep.mubr.f32.mxu0 0.0
    %2288 = vmatmul.mubr.f32.gmra.mxu0 %v2215
    %v2289 = vpop.f32.mrf.mxu0
    %v2290 = vadd.f32 0.0, %v2289
    %v2291 = vpop.f32.mrf.mxu0
    %2292 = vmatprep.mubr.f32.mxu0 0.0
    %2293 = vmatmul.mubr.f32.gmra.mxu0 %v2216
    %v2294 = vpop.f32.mrf.mxu0
    %v2295 = vadd.f32 0.0, %v2294
    %v2296 = vpop.f32.mrf.mxu0
    %2297 = vmatprep.mubr.f32.mxu0 0.0
    %2298 = vmatmul.mubr.f32.gmra.mxu0 %v2217
    %v2299 = vpop.f32.mrf.mxu0
    %v2300 = vadd.f32 0.0, %v2299
    %v2301 = vpop.f32.mrf.mxu0
    %2302 = vdwg.mxu0
    %v2303 = vmul.f32 %v2285, 0.0078125
    %v2304 = vmul.f32 %v2290, 0.0078125
    %v2305 = vmul.f32 %v2295, 0.0078125
    %v2306 = vmul.f32 %v2300, 0.0078125
    %v2307 = vadd.f32 %v2303, 1e-05
    %v2308 = vadd.f32 %v2304, 1e-05
    %v2309 = vadd.f32 %v2305, 1e-05
    %v2310 = vadd.f32 %v2306, 1e-05
    %v2311 = vrsqrt.pop %v2307
    %v2312 = vrsqrt.pop %v2308
    %v2313 = vrsqrt.pop %v2309
    %v2314 = vrsqrt.pop %v2310
    %2316 = vset.pattern.permute.xlu0 0
    %2317 = vperm.xlu0 %2316, %v2311
    %v2318 = vpop.permute.xlu0 %2317
    %2321 = vset.pattern.permute.xlu0 0
    %2322 = vperm.xlu0 %2321, %v2312
    %v2323 = vpop.permute.xlu0 %2322
    %2326 = vset.pattern.permute.xlu0 0
    %2327 = vperm.xlu0 %2326, %v2313
    %v2328 = vpop.permute.xlu0 %2327
    %2331 = vset.pattern.permute.xlu0 0
    %2332 = vperm.xlu0 %2331, %v2314
    %v2333 = vpop.permute.xlu0 %2332
    %v2335 = vmul.f32 %v2210, %v2318
    %v2336 = vmul.f32 %v2211, %v2323
    %v2337 = vmul.f32 %v2212, %v2328
    %v2338 = vmul.f32 %v2213, %v2333
    %v2339 = vmax.f32 %v2335, 0.0
    %v2340 = vmax.f32 %v2336, 0.0
    %v2341 = vmax.f32 %v2337, 0.0
    %v2342 = vmax.f32 %v2338, 0.0
    %2343 = vst [vmem:[#allocation11] sm:$0xff] %v2339
    %2344 = vst [vmem:[#allocation11 + $0x8] sm:$0xff] %v2340
    %2345 = vst [vmem:[#allocation11 + $0x10] sm:$0xff] %v2341
    %2346 = vst [vmem:[#allocation11 + $0x18] sm:$0xff] %v2342
    // Predicated region
    $region74: #{tpu_custom_call.1} parent=1 // pred_check
      _
    $region75: #{tpu_custom_call.1} parent=1 // pred_check_branch
      %2348 = sbr.rel (0) target = $region77
    $region76: #{tpu_custom_call.1} parent=1 // pred_region
      %s2350 = ssub.s32 512, 512
      %2351 = vsyncadd [#allocation4], %s2350
      %s2352 = sshll.u32 [#allocation11], 4
      %s2353 = int_to_ptr.vmem [resolvable:$true] %s2352
      %2358 = dma.vmem_to_hbm [thread:$0]  %s2353, 512, %s13, [#allocation4], 128, 128, 8
    $region77: #{tpu_custom_call.1} parent=1 // pred_fallthru
      _
    // Predicated region
    $region78: #{tpu_custom_call.1} parent=1 // pred_check
      _
    $region79: #{tpu_custom_call.1} parent=1 // pred_check_branch
      %2360 = sbr.rel (0) target = $region81
    $region80: #{tpu_custom_call.1} parent=1 // pred_region
      %2361 = dma.done [#allocation4], 512
    $region81: #{tpu_custom_call.1} parent=1 // pred_fallthru
      _
    %2362 = vsyncpa [#allocation3], 1
    %2363 = vsyncpa [#allocation6], 1
    %2364 = vsyncpa [#allocation9], 1
    %2365 = vsyncpa [#allocation4], 1

</llo_original>
